<compile_context>
chip_gen: v6e
topology: v6e:2x2x1
jax: 0.10.0
libtpu: 0.0.40
codegen_flags: <defaults>
</compile_context>

<pallas_src>
import jax
import jax.numpy as jnp
from jax.experimental import pallas as pl
from jax.experimental.pallas import tpu as pltpu


def _round_up(x: int, m: int) -> int:
    return (x + m - 1) // m * m


def _cdiv(a: int, b: int) -> int:
    return -(-a // b)


# -----------------------------------------------------------------------------
# Kernel: one batch tile through the full 5-layer MLP.
#   x tile arrives f32 and is cast to bf16 in-kernel; weights are resident bf16;
#   biases are a single stacked f32 (5, max_out_pad) block added to the f32 MXU
#   accumulator; every hidden activation is re-cast to bf16 before the next dot.
# -----------------------------------------------------------------------------
def mlp4_kernel(x_ref, b_ref,
                w1_ref, w2_ref, w3_ref, w4_ref, w5_ref,
                o_ref):
    def layer(h, w_ref, idx, relu):
        n = w_ref.shape[1]                       # padded out-dim (static)
        a = jnp.dot(h, w_ref[...], preferred_element_type=jnp.float32)
        a = a + b_ref[idx:idx + 1, :n]           # f32 bias on f32 accumulator
        if relu:
            return jnp.maximum(a, 0.0).astype(jnp.bfloat16)  # bf16 feeds next MXU
        return a                                 # final layer stays f32

    h = x_ref[...].astype(jnp.bfloat16)          # in-kernel cast (hidden under MXU)
    h = layer(h, w1_ref, 0, True)                # 384w        -> pad(96w)
    h = layer(h, w2_ref, 1, True)                # pad(96w)    -> pad(48w)
    h = layer(h, w3_ref, 2, True)                # pad(48w)    -> pad(24w)
    h = layer(h, w4_ref, 3, True)                # pad(24w)    -> pad(100)=128
    o = layer(h, w5_ref, 4, False)               # 128         -> pad(9)=128
    o_ref[...] = o.astype(o_ref.dtype)


# -----------------------------------------------------------------------------
# Parameters (PyTorch-equivalent) and padded/bf16 prep for the kernel.
# -----------------------------------------------------------------------------
def mlp4_dims(width: int):
    return [384 * width,
            384 * width // 4,
            384 * width // 8,
            384 * width // 16,
            100,
            9]


def make_params(width: int, key):
    """f32 params matching torch.nn.Linear init shapes.
    Weights stored (in, out) == Linear.weight.T ; bias (out,)."""
    dims = mlp4_dims(width)
    params = []
    for i in range(5):
        key, kw, kb = jax.random.split(key, 3)
        scale = 1.0 / float(dims[i]) ** 0.5
        w = jax.random.uniform(kw, (dims[i], dims[i + 1]), jnp.float32,
                               minval=-scale, maxval=scale)
        b = jax.random.uniform(kb, (dims[i + 1],), jnp.float32,
                               minval=-scale, maxval=scale)
        params.append((w, b))
    return params


def prepare_padded_params(params):
    """Zero-pad every layer's in/out dims to 128-lane multiples (math-preserving:
    padded columns get bias 0 -> ReLU(0)=0 -> contribute 0 downstream), cast
    weights to bf16, and stack all biases into one f32 (5, max_out_pad) block."""
    w_list, b_info, out_pads = [], [], []
    for w, b in params:
        d_in, d_out = w.shape
        p_in, p_out = _round_up(d_in, 128), _round_up(d_out, 128)
        wp = jnp.zeros((p_in, p_out), jnp.float32).at[:d_in, :d_out].set(w)
        w_list.append(wp.astype(jnp.bfloat16))
        b_info.append((b, d_out))
        out_pads.append(p_out)
    max_out = max(out_pads)
    b_stack = jnp.zeros((len(params), max_out), jnp.float32)
    for i, (b, d_out) in enumerate(b_info):
        b_stack = b_stack.at[i, :d_out].set(b)
    return w_list, b_stack


# -----------------------------------------------------------------------------
# Wrapper
# -----------------------------------------------------------------------------
def mlp4_forward(x, w_list, b_stack, width: int):
    """x: (B, width, 384) float32 -> (B, 9) float32."""
    B = x.shape[0]
    d0 = x.shape[2] * width                  # 384*width, multiple of 128
    out_pad = w_list[-1].shape[1]            # 128 (lane-dense output)
    n_out = 9

    x2d = x.reshape(B, d0)                   # stays f32; cast happens in-kernel

    # --- generation-aware VMEM budget ---------------------------------------
    try:
        vmem_cap = int(pltpu.get_tpu_info().vmem_capacity_bytes)
    except Exception:
        vmem_cap = 64 << 20                  # conservative: v7x per-TC VMEM
    vmem_budget = (vmem_cap * 3) // 4        # leave compiler-scratch headroom

    weight_bytes = sum(int(w.size) * 2 for w in w_list) + int(b_stack.size) * 4
    # TODO(synk): for very large `width` (resident weights approaching the VMEM
    # budget, ~half the width threshold on v7x) switch layer 1 to a K-tiled
    # "arbitrary" grid axis with an f32 VMEM accumulator instead of holding all
    # weights resident.

    # --- batch tile selection -------------------------------------------------
    # Per-row pipelined VMEM: x tile f32 (x2 buffers) + out tile f32 (x2) +
    # rough allowance for bf16/h intermediates.
    per_row = 2 * d0 * 4 + 2 * out_pad * 4 + d0 * 2 + 4 * out_pad * 4
    avail = max(vmem_budget - weight_bytes - (8 << 20), 1 << 20)
    tb_cap = int(max(256, min(2048, (avail // per_row) // 256 * 256)))

    if B <= 8:
        TB, steps = _round_up(max(B, 1), 8), 1
    else:
        # Deep, 256-aligned M tiles keep a 2x256x256 MXU busy when K=N=128
        # (v6e/v7x); on v5e 128-alignment would suffice but 256 also works.
        align = 256 if B >= 256 else (128 if B >= 128 else 8)
        B_al = _round_up(B, align)
        steps = max(1, _cdiv(B_al, tb_cap))
        # >=2 grid steps once there is enough work: lets ("parallel",) shard the
        # batch across both TCs on v7x; costs one ~0.35us step on 1-TC chips.
        if steps < 2 and B_al >= 2 * align:
            steps = 2
        TB = _round_up(_cdiv(B_al, steps), align)
    B_pad = TB * steps
    if B_pad != B:
        x2d = jnp.pad(x2d, ((0, B_pad - B), (0, 0)))
    grid = (steps,)

    # --- build & run ----------------------------------------------------------
    def run(single_buffer_weights: bool):
        def resident_spec(shape):
            # Constant index_map -> block never re-fetched; single-buffer it so a
            # second copy of the weights isn't wasted in VMEM.
            if single_buffer_weights:
                return pl.BlockSpec(shape, lambda i: (0, 0),
                                    pipeline_mode=pl.Buffered(1))
            return pl.BlockSpec(shape, lambda i: (0, 0))

        in_specs = [pl.BlockSpec((TB, d0), lambda i: (i, 0)),
                    resident_spec(b_stack.shape)]
        in_specs += [resident_spec(w.shape) for w in w_list]
        out_specs = pl.BlockSpec((TB, out_pad), lambda i: (i, 0))

        flops = 2 * B_pad * sum(int(w.shape[0]) * int(w.shape[1]) for w in w_list)
        bytes_accessed = B_pad * d0 * 4 + weight_bytes + B_pad * out_pad * 4
        cost = pl.CostEstimate(flops=flops, transcendentals=0,
                               bytes_accessed=bytes_accessed)

        weight_mult = 1 if single_buffer_weights else 2
        act_bytes = 2 * TB * (d0 * 4 + out_pad * 4)
        vmem_limit = weight_mult * weight_bytes + act_bytes + (8 << 20)
        vmem_limit = int(min(max(vmem_limit, 32 << 20), vmem_budget))

        out = pl.pallas_call(
            mlp4_kernel,
            out_shape=jax.ShapeDtypeStruct((B_pad, out_pad), jnp.float32),
            grid=grid,
            in_specs=in_specs,
            out_specs=out_specs,
            compiler_params=pltpu.CompilerParams(
                dimension_semantics=("parallel",),   # megacore sharding on v7x
                vmem_limit_bytes=vmem_limit),
            cost_estimate=cost,
        )(x2d, b_stack, *w_list)
        return jax.block_until_ready(out)

    try:
        out = run(True)
    except Exception:
        # Fallback for JAX builds without pipeline_mode support on pallas_call.
        out = run(False)

    # Drop batch / lane padding; reproduce `x.view(x.shape[0], x.shape[-1])`.
    return out[:B, :n_out]


def reference_forward(x, params, width: int):
    """Pure-JAX f32 reference (matches the PyTorch module)."""
    h = x.reshape(x.shape[0], x.shape[2] * width)
    for i, (w, b) in enumerate(params):
        h = h @ w + b
        if i < 4:
            h = jnp.maximum(h, 0.0)
    return h


if __name__ == "__main__":
    width = 1          # dims: 384 -> 96 -> 48 -> 24 -> 100 -> 9
    B = 2

    key = jax.random.PRNGKey(0)
    key, kx = jax.random.split(key)
    x = jax.random.normal(kx, (B, width, 384), jnp.float32)

    params = make_params(width, key)                 # f32, PyTorch-equivalent
    w_list, b_stack = prepare_padded_params(params)  # bf16 weights, stacked biases

    out = jax.block_until_ready(mlp4_forward(x, w_list, b_stack, width))
    ref = reference_forward(x, params, width)

    assert out.shape == (B, 9), out.shape
    # bf16 matmul inputs (f32 accumulate) -> loosened tolerance vs f32 reference.
    max_err = float(jnp.max(jnp.abs(out - ref)))
    ref_scale = float(jnp.max(jnp.abs(ref))) + 1e-6
    assert max_err <= 0.05 * ref_scale + 0.05, (max_err, ref_scale)

    print("KERNEL_OK")
</pallas_src>

<mosaic_0001>
module attributes {stable_mosaic.version = 11 : i64} {
  func.func @mlp4_kernel(%arg0: i32, %arg1: memref<8x384xf32, #tpu.memory_space<vmem>>, %arg2: memref<5x128xf32, #tpu.memory_space<vmem>>, %arg3: memref<384x128xbf16, #tpu.memory_space<vmem>>, %arg4: memref<128x128xbf16, #tpu.memory_space<vmem>>, %arg5: memref<128x128xbf16, #tpu.memory_space<vmem>>, %arg6: memref<128x128xbf16, #tpu.memory_space<vmem>>, %arg7: memref<128x128xbf16, #tpu.memory_space<vmem>>, %arg8: memref<8x128xf32, #tpu.memory_space<vmem>>) attributes {dimension_semantics = [#tpu.dimension_semantics<parallel>], iteration_bounds = array<i64: 1>, scalar_prefetch = 0 : i64, scratch_operands = 0 : i64, tpu.core_type = #tpu.core_type<tc>, window_params = [{transform_indices = @transform_0, window_bounds = array<i64: 8, 384>}, {pipeline_mode = #tpu.pipeline_mode<synchronous>, transform_indices = @transform_1, window_bounds = array<i64: 5, 128>}, {pipeline_mode = #tpu.pipeline_mode<synchronous>, transform_indices = @transform_2, window_bounds = array<i64: 384, 128>}, {pipeline_mode = #tpu.pipeline_mode<synchronous>, transform_indices = @transform_3, window_bounds = array<i64: 128, 128>}, {pipeline_mode = #tpu.pipeline_mode<synchronous>, transform_indices = @transform_4, window_bounds = array<i64: 128, 128>}, {pipeline_mode = #tpu.pipeline_mode<synchronous>, transform_indices = @transform_5, window_bounds = array<i64: 128, 128>}, {pipeline_mode = #tpu.pipeline_mode<synchronous>, transform_indices = @transform_6, window_bounds = array<i64: 128, 128>}, {transform_indices = @transform_7, window_bounds = array<i64: 8, 128>}]} {
    %c0 = arith.constant 0 : index
    %c0_0 = arith.constant 0 : index
    %0 = vector.load %arg1[%c0, %c0_0] : memref<8x384xf32, #tpu.memory_space<vmem>>, vector<8x384xf32>
    %1 = arith.truncf %0 : vector<8x384xf32> to vector<8x384xbf16>
    %c0_1 = arith.constant 0 : index
    %c0_2 = arith.constant 0 : index
    %2 = vector.load %arg3[%c0_1, %c0_2] : memref<384x128xbf16, #tpu.memory_space<vmem>>, vector<384x128xbf16>
    %cst = arith.constant dense<0.000000e+00> : vector<8x128xf32>
    %3 = tpu.matmul %1, %2, %cst {dimension_numbers = #tpu.dot_dimension_numbers<[1], [0], [0], [1], [0, 0, 1, 1], [], []>} : vector<8x384xbf16>, vector<384x128xbf16>, vector<8x128xf32> -> vector<8x128xf32>
    %c0_3 = arith.constant 0 : index
    %c0_4 = arith.constant 0 : index
    %4 = vector.load %arg2[%c0_3, %c0_4] : memref<5x128xf32, #tpu.memory_space<vmem>>, vector<1x128xf32>
    %5 = vector.broadcast %4 : vector<1x128xf32> to vector<8x128xf32>
    %6 = arith.addf %3, %5 : vector<8x128xf32>
    %cst_5 = arith.constant 0.000000e+00 : f32
    %7 = vector.broadcast %cst_5 : f32 to vector<8x128xf32>
    %8 = arith.maximumf %6, %7 : vector<8x128xf32>
    %9 = arith.truncf %8 : vector<8x128xf32> to vector<8x128xbf16>
    %c0_6 = arith.constant 0 : index
    %c0_7 = arith.constant 0 : index
    %10 = vector.load %arg4[%c0_6, %c0_7] : memref<128x128xbf16, #tpu.memory_space<vmem>>, vector<128x128xbf16>
    %cst_8 = arith.constant dense<0.000000e+00> : vector<8x128xf32>
    %11 = tpu.matmul %9, %10, %cst_8 {dimension_numbers = #tpu.dot_dimension_numbers<[1], [0], [0], [1], [0, 0, 1, 1], [], []>} : vector<8x128xbf16>, vector<128x128xbf16>, vector<8x128xf32> -> vector<8x128xf32>
    %c1 = arith.constant 1 : index
    %c0_9 = arith.constant 0 : index
    %12 = vector.load %arg2[%c1, %c0_9] : memref<5x128xf32, #tpu.memory_space<vmem>>, vector<1x128xf32>
    %13 = vector.broadcast %12 : vector<1x128xf32> to vector<8x128xf32>
    %14 = arith.addf %11, %13 : vector<8x128xf32>
    %cst_10 = arith.constant 0.000000e+00 : f32
    %15 = vector.broadcast %cst_10 : f32 to vector<8x128xf32>
    %16 = arith.maximumf %14, %15 : vector<8x128xf32>
    %17 = arith.truncf %16 : vector<8x128xf32> to vector<8x128xbf16>
    %c0_11 = arith.constant 0 : index
    %c0_12 = arith.constant 0 : index
    %18 = vector.load %arg5[%c0_11, %c0_12] : memref<128x128xbf16, #tpu.memory_space<vmem>>, vector<128x128xbf16>
    %cst_13 = arith.constant dense<0.000000e+00> : vector<8x128xf32>
    %19 = tpu.matmul %17, %18, %cst_13 {dimension_numbers = #tpu.dot_dimension_numbers<[1], [0], [0], [1], [0, 0, 1, 1], [], []>} : vector<8x128xbf16>, vector<128x128xbf16>, vector<8x128xf32> -> vector<8x128xf32>
    %c2 = arith.constant 2 : index
    %c0_14 = arith.constant 0 : index
    %20 = vector.load %arg2[%c2, %c0_14] : memref<5x128xf32, #tpu.memory_space<vmem>>, vector<1x128xf32>
    %21 = vector.broadcast %20 : vector<1x128xf32> to vector<8x128xf32>
    %22 = arith.addf %19, %21 : vector<8x128xf32>
    %cst_15 = arith.constant 0.000000e+00 : f32
    %23 = vector.broadcast %cst_15 : f32 to vector<8x128xf32>
    %24 = arith.maximumf %22, %23 : vector<8x128xf32>
    %25 = arith.truncf %24 : vector<8x128xf32> to vector<8x128xbf16>
    %c0_16 = arith.constant 0 : index
    %c0_17 = arith.constant 0 : index
    %26 = vector.load %arg6[%c0_16, %c0_17] : memref<128x128xbf16, #tpu.memory_space<vmem>>, vector<128x128xbf16>
    %cst_18 = arith.constant dense<0.000000e+00> : vector<8x128xf32>
    %27 = tpu.matmul %25, %26, %cst_18 {dimension_numbers = #tpu.dot_dimension_numbers<[1], [0], [0], [1], [0, 0, 1, 1], [], []>} : vector<8x128xbf16>, vector<128x128xbf16>, vector<8x128xf32> -> vector<8x128xf32>
    %c3 = arith.constant 3 : index
    %c0_19 = arith.constant 0 : index
    %28 = vector.load %arg2[%c3, %c0_19] : memref<5x128xf32, #tpu.memory_space<vmem>>, vector<1x128xf32>
    %29 = vector.broadcast %28 : vector<1x128xf32> to vector<8x128xf32>
    %30 = arith.addf %27, %29 : vector<8x128xf32>
    %cst_20 = arith.constant 0.000000e+00 : f32
    %31 = vector.broadcast %cst_20 : f32 to vector<8x128xf32>
    %32 = arith.maximumf %30, %31 : vector<8x128xf32>
    %33 = arith.truncf %32 : vector<8x128xf32> to vector<8x128xbf16>
    %c0_21 = arith.constant 0 : index
    %c0_22 = arith.constant 0 : index
    %34 = vector.load %arg7[%c0_21, %c0_22] : memref<128x128xbf16, #tpu.memory_space<vmem>>, vector<128x128xbf16>
    %cst_23 = arith.constant dense<0.000000e+00> : vector<8x128xf32>
    %35 = tpu.matmul %33, %34, %cst_23 {dimension_numbers = #tpu.dot_dimension_numbers<[1], [0], [0], [1], [0, 0, 1, 1], [], []>} : vector<8x128xbf16>, vector<128x128xbf16>, vector<8x128xf32> -> vector<8x128xf32>
    %c4 = arith.constant 4 : index
    %c0_24 = arith.constant 0 : index
    %36 = vector.load %arg2[%c4, %c0_24] : memref<5x128xf32, #tpu.memory_space<vmem>>, vector<1x128xf32>
    %37 = vector.broadcast %36 : vector<1x128xf32> to vector<8x128xf32>
    %38 = arith.addf %35, %37 : vector<8x128xf32>
    %c0_25 = arith.constant 0 : index
    %c0_26 = arith.constant 0 : index
    %39 = vector.load %arg8[%c0_25, %c0_26] : memref<8x128xf32, #tpu.memory_space<vmem>>, vector<8x128xf32>
    tpu.vector_store %arg8[%c0_25, %c0_26], %38 {strides = array<i32>} : memref<8x128xf32, #tpu.memory_space<vmem>>, vector<8x128xf32>,
    return
  }
  func.func @transform_0(%arg0: i32) -> (i32, i32) {
    %c0_i32 = arith.constant 0 : i32
    %c0_i32_0 = arith.constant 0 : i32
    return %arg0, %c0_i32 : i32, i32
  }
  func.func @transform_1(%arg0: i32) -> (i32, i32) {
    %c0_i32 = arith.constant 0 : i32
    %c0_i32_0 = arith.constant 0 : i32
    %c0_i32_1 = arith.constant 0 : i32
    return %c0_i32, %c0_i32_0 : i32, i32
  }
  func.func @transform_2(%arg0: i32) -> (i32, i32) {
    %c0_i32 = arith.constant 0 : i32
    %c0_i32_0 = arith.constant 0 : i32
    %c0_i32_1 = arith.constant 0 : i32
    return %c0_i32, %c0_i32_0 : i32, i32
  }
  func.func @transform_3(%arg0: i32) -> (i32, i32) {
    %c0_i32 = arith.constant 0 : i32
    %c0_i32_0 = arith.constant 0 : i32
    %c0_i32_1 = arith.constant 0 : i32
    return %c0_i32, %c0_i32_0 : i32, i32
  }
  func.func @transform_4(%arg0: i32) -> (i32, i32) {
    %c0_i32 = arith.constant 0 : i32
    %c0_i32_0 = arith.constant 0 : i32
    %c0_i32_1 = arith.constant 0 : i32
    return %c0_i32, %c0_i32_0 : i32, i32
  }
  func.func @transform_5(%arg0: i32) -> (i32, i32) {
    %c0_i32 = arith.constant 0 : i32
    %c0_i32_0 = arith.constant 0 : i32
    %c0_i32_1 = arith.constant 0 : i32
    return %c0_i32, %c0_i32_0 : i32, i32
  }
  func.func @transform_6(%arg0: i32) -> (i32, i32) {
    %c0_i32 = arith.constant 0 : i32
    %c0_i32_0 = arith.constant 0 : i32
    %c0_i32_1 = arith.constant 0 : i32
    return %c0_i32, %c0_i32_0 : i32, i32
  }
  func.func @transform_7(%arg0: i32) -> (i32, i32) {
    %c0_i32 = arith.constant 0 : i32
    %c0_i32_0 = arith.constant 0 : i32
    return %arg0, %c0_i32 : i32, i32
  }
}

module attributes {stable_mosaic.version = 11 : i64} {
  func.func @mlp4_kernel(%arg0: i32, %arg1: memref<8x384xf32, #tpu.memory_space<vmem>>, %arg2: memref<5x128xf32, #tpu.memory_space<vmem>>, %arg3: memref<384x128xbf16, #tpu.memory_space<vmem>>, %arg4: memref<128x128xbf16, #tpu.memory_space<vmem>>, %arg5: memref<128x128xbf16, #tpu.memory_space<vmem>>, %arg6: memref<128x128xbf16, #tpu.memory_space<vmem>>, %arg7: memref<128x128xbf16, #tpu.memory_space<vmem>>, %arg8: memref<8x128xf32, #tpu.memory_space<vmem>>) attributes {dimension_semantics = [#tpu.dimension_semantics<parallel>], iteration_bounds = array<i64: 1>, scalar_prefetch = 0 : i64, scratch_operands = 0 : i64, tpu.core_type = #tpu.core_type<tc>, window_params = [{transform_indices = @transform_0, window_bounds = array<i64: 8, 384>}, {pipeline_mode = #tpu.pipeline_mode<synchronous>, transform_indices = @transform_1, window_bounds = array<i64: 5, 128>}, {pipeline_mode = #tpu.pipeline_mode<synchronous>, transform_indices = @transform_2, window_bounds = array<i64: 384, 128>}, {pipeline_mode = #tpu.pipeline_mode<synchronous>, transform_indices = @transform_3, window_bounds = array<i64: 128, 128>}, {pipeline_mode = #tpu.pipeline_mode<synchronous>, transform_indices = @transform_4, window_bounds = array<i64: 128, 128>}, {pipeline_mode = #tpu.pipeline_mode<synchronous>, transform_indices = @transform_5, window_bounds = array<i64: 128, 128>}, {pipeline_mode = #tpu.pipeline_mode<synchronous>, transform_indices = @transform_6, window_bounds = array<i64: 128, 128>}, {transform_indices = @transform_7, window_bounds = array<i64: 8, 128>}]} {
    %c0 = arith.constant 0 : index
    %c0_0 = arith.constant 0 : index
    %0 = vector.load %arg1[%c0, %c0_0] : memref<8x384xf32, #tpu.memory_space<vmem>>, vector<8x384xf32>
    %1 = arith.truncf %0 : vector<8x384xf32> to vector<8x384xbf16>
    %c0_1 = arith.constant 0 : index
    %c0_2 = arith.constant 0 : index
    %2 = vector.load %arg3[%c0_1, %c0_2] : memref<384x128xbf16, #tpu.memory_space<vmem>>, vector<384x128xbf16>
    %cst = arith.constant dense<0.000000e+00> : vector<8x128xf32>
    %3 = tpu.matmul %1, %2, %cst {dimension_numbers = #tpu.dot_dimension_numbers<[1], [0], [0], [1], [0, 0, 1, 1], [], []>} : vector<8x384xbf16>, vector<384x128xbf16>, vector<8x128xf32> -> vector<8x128xf32>
    %c0_3 = arith.constant 0 : index
    %c0_4 = arith.constant 0 : index
    %4 = vector.load %arg2[%c0_3, %c0_4] : memref<5x128xf32, #tpu.memory_space<vmem>>, vector<1x128xf32>
    %5 = vector.broadcast %4 : vector<1x128xf32> to vector<8x128xf32>
    %6 = arith.addf %3, %5 : vector<8x128xf32>
    %cst_5 = arith.constant 0.000000e+00 : f32
    %7 = vector.broadcast %cst_5 : f32 to vector<8x128xf32>
    %8 = arith.maximumf %6, %7 : vector<8x128xf32>
    %9 = arith.truncf %8 : vector<8x128xf32> to vector<8x128xbf16>
    %c0_6 = arith.constant 0 : index
    %c0_7 = arith.constant 0 : index
    %10 = vector.load %arg4[%c0_6, %c0_7] : memref<128x128xbf16, #tpu.memory_space<vmem>>, vector<128x128xbf16>
    %cst_8 = arith.constant dense<0.000000e+00> : vector<8x128xf32>
    %11 = tpu.matmul %9, %10, %cst_8 {dimension_numbers = #tpu.dot_dimension_numbers<[1], [0], [0], [1], [0, 0, 1, 1], [], []>} : vector<8x128xbf16>, vector<128x128xbf16>, vector<8x128xf32> -> vector<8x128xf32>
    %c1 = arith.constant 1 : index
    %c0_9 = arith.constant 0 : index
    %12 = vector.load %arg2[%c1, %c0_9] : memref<5x128xf32, #tpu.memory_space<vmem>>, vector<1x128xf32>
    %13 = vector.broadcast %12 : vector<1x128xf32> to vector<8x128xf32>
    %14 = arith.addf %11, %13 : vector<8x128xf32>
    %cst_10 = arith.constant 0.000000e+00 : f32
    %15 = vector.broadcast %cst_10 : f32 to vector<8x128xf32>
    %16 = arith.maximumf %14, %15 : vector<8x128xf32>
    %17 = arith.truncf %16 : vector<8x128xf32> to vector<8x128xbf16>
    %c0_11 = arith.constant 0 : index
    %c0_12 = arith.constant 0 : index
    %18 = vector.load %arg5[%c0_11, %c0_12] : memref<128x128xbf16, #tpu.memory_space<vmem>>, vector<128x128xbf16>
    %cst_13 = arith.constant dense<0.000000e+00> : vector<8x128xf32>
    %19 = tpu.matmul %17, %18, %cst_13 {dimension_numbers = #tpu.dot_dimension_numbers<[1], [0], [0], [1], [0, 0, 1, 1], [], []>} : vector<8x128xbf16>, vector<128x128xbf16>, vector<8x128xf32> -> vector<8x128xf32>
    %c2 = arith.constant 2 : index
    %c0_14 = arith.constant 0 : index
    %20 = vector.load %arg2[%c2, %c0_14] : memref<5x128xf32, #tpu.memory_space<vmem>>, vector<1x128xf32>
    %21 = vector.broadcast %20 : vector<1x128xf32> to vector<8x128xf32>
    %22 = arith.addf %19, %21 : vector<8x128xf32>
    %cst_15 = arith.constant 0.000000e+00 : f32
    %23 = vector.broadcast %cst_15 : f32 to vector<8x128xf32>
    %24 = arith.maximumf %22, %23 : vector<8x128xf32>
    %25 = arith.truncf %24 : vector<8x128xf32> to vector<8x128xbf16>
    %c0_16 = arith.constant 0 : index
    %c0_17 = arith.constant 0 : index
    %26 = vector.load %arg6[%c0_16, %c0_17] : memref<128x128xbf16, #tpu.memory_space<vmem>>, vector<128x128xbf16>
    %cst_18 = arith.constant dense<0.000000e+00> : vector<8x128xf32>
    %27 = tpu.matmul %25, %26, %cst_18 {dimension_numbers = #tpu.dot_dimension_numbers<[1], [0], [0], [1], [0, 0, 1, 1], [], []>} : vector<8x128xbf16>, vector<128x128xbf16>, vector<8x128xf32> -> vector<8x128xf32>
    %c3 = arith.constant 3 : index
    %c0_19 = arith.constant 0 : index
    %28 = vector.load %arg2[%c3, %c0_19] : memref<5x128xf32, #tpu.memory_space<vmem>>, vector<1x128xf32>
    %29 = vector.broadcast %28 : vector<1x128xf32> to vector<8x128xf32>
    %30 = arith.addf %27, %29 : vector<8x128xf32>
    %cst_20 = arith.constant 0.000000e+00 : f32
    %31 = vector.broadcast %cst_20 : f32 to vector<8x128xf32>
    %32 = arith.maximumf %30, %31 : vector<8x128xf32>
    %33 = arith.truncf %32 : vector<8x128xf32> to vector<8x128xbf16>
    %c0_21 = arith.constant 0 : index
    %c0_22 = arith.constant 0 : index
    %34 = vector.load %arg7[%c0_21, %c0_22] : memref<128x128xbf16, #tpu.memory_space<vmem>>, vector<128x128xbf16>
    %cst_23 = arith.constant dense<0.000000e+00> : vector<8x128xf32>
    %35 = tpu.matmul %33, %34, %cst_23 {dimension_numbers = #tpu.dot_dimension_numbers<[1], [0], [0], [1], [0, 0, 1, 1], [], []>} : vector<8x128xbf16>, vector<128x128xbf16>, vector<8x128xf32> -> vector<8x128xf32>
    %c4 = arith.constant 4 : index
    %c0_24 = arith.constant 0 : index
    %36 = vector.load %arg2[%c4, %c0_24] : memref<5x128xf32, #tpu.memory_space<vmem>>, vector<1x128xf32>
    %37 = vector.broadcast %36 : vector<1x128xf32> to vector<8x128xf32>
    %38 = arith.addf %35, %37 : vector<8x128xf32>
    %c0_25 = arith.constant 0 : index
    %c0_26 = arith.constant 0 : index
    %39 = vector.load %arg8[%c0_25, %c0_26] : memref<8x128xf32, #tpu.memory_space<vmem>>, vector<8x128xf32>
    tpu.vector_store %arg8[%c0_25, %c0_26], %38 {strides = array<i32>} : memref<8x128xf32, #tpu.memory_space<vmem>>, vector<8x128xf32>,
    return
  }
  func.func @transform_0(%arg0: i32) -> (i32, i32) {
    %c0_i32 = arith.constant 0 : i32
    %c0_i32_0 = arith.constant 0 : i32
    return %arg0, %c0_i32 : i32, i32
  }
  func.func @transform_1(%arg0: i32) -> (i32, i32) {
    %c0_i32 = arith.constant 0 : i32
    %c0_i32_0 = arith.constant 0 : i32
    %c0_i32_1 = arith.constant 0 : i32
    return %c0_i32, %c0_i32_0 : i32, i32
  }
  func.func @transform_2(%arg0: i32) -> (i32, i32) {
    %c0_i32 = arith.constant 0 : i32
    %c0_i32_0 = arith.constant 0 : i32
    %c0_i32_1 = arith.constant 0 : i32
    return %c0_i32, %c0_i32_0 : i32, i32
  }
  func.func @transform_3(%arg0: i32) -> (i32, i32) {
    %c0_i32 = arith.constant 0 : i32
    %c0_i32_0 = arith.constant 0 : i32
    %c0_i32_1 = arith.constant 0 : i32
    return %c0_i32, %c0_i32_0 : i32, i32
  }
  func.func @transform_4(%arg0: i32) -> (i32, i32) {
    %c0_i32 = arith.constant 0 : i32
    %c0_i32_0 = arith.constant 0 : i32
    %c0_i32_1 = arith.constant 0 : i32
    return %c0_i32, %c0_i32_0 : i32, i32
  }
  func.func @transform_5(%arg0: i32) -> (i32, i32) {
    %c0_i32 = arith.constant 0 : i32
    %c0_i32_0 = arith.constant 0 : i32
    %c0_i32_1 = arith.constant 0 : i32
    return %c0_i32, %c0_i32_0 : i32, i32
  }
  func.func @transform_6(%arg0: i32) -> (i32, i32) {
    %c0_i32 = arith.constant 0 : i32
    %c0_i32_0 = arith.constant 0 : i32
    %c0_i32_1 = arith.constant 0 : i32
    return %c0_i32, %c0_i32_0 : i32, i32
  }
  func.func @transform_7(%arg0: i32) -> (i32, i32) {
    %c0_i32 = arith.constant 0 : i32
    %c0_i32_0 = arith.constant 0 : i32
    return %arg0, %c0_i32 : i32, i32
  }
}

</mosaic_0001>

<llo_original>
// kernel: tpu_custom_call.1
$region0: #{tpu_custom_call.1}
  #allocation0 [shape = 'u32[]', space=smem, size = 0x4, offset = 0x4, fixed_abs, tag = 'smem constant byte address 0x4 - core index']
  #allocation1 [shape = 'u32[144,128]{1,0:T(1,128)}', space=vmem, size = 0x12000, scoped, tag = 'internal scratch']
  %s0 = inlined_call_operand.hbm [shape: f32[8,384], index: 0, kind: input, shape index: {}]
  %s1 = inlined_call_operand.hbm [shape: f32[5,128], index: 1, kind: input, shape index: {}]
  %s2 = inlined_call_operand.hbm [shape: bf16[384,128], index: 2, kind: input, shape index: {}]
  %s3 = inlined_call_operand.hbm [shape: bf16[128,128], index: 3, kind: input, shape index: {}]
  %s4 = inlined_call_operand.hbm [shape: bf16[128,128], index: 4, kind: input, shape index: {}]
  %s5 = inlined_call_operand.hbm [shape: bf16[128,128], index: 5, kind: input, shape index: {}]
  %s6 = inlined_call_operand.hbm [shape: bf16[128,128], index: 6, kind: input, shape index: {}]
  %s7 = inlined_call_operand.hbm [shape: f32[8,128], index: 7, kind: output, shape index: {}]
  %s8 = sld [smem:[#allocation0]]
  $region66: #{tpu_custom_call.1} parent=0
    _
  %s10 = ssub.s32 1, %s8
  %s11 = scalar_select 0, %s10, %s8
  $region1: #{tpu_custom_call.1} parent=0
    #allocation2 [shape = 'u8[12288]{0}', space=vmem, size = 0x3000, scoped, tag = 'input window, operand 0, single buffered']
    #allocation3 [shape = 's32[1]{0}', space=sflag, size = 0x4, scoped, tag = 'scoped memory for tpu_custom_call.1']
    #allocation4 [shape = 's32[1]{0}', space=sflag, size = 0x4, scoped, tag = 'scoped memory for tpu_custom_call.1']
    #allocation5 [shape = 'u8[4096]{0}', space=vmem, size = 0x1000, scoped, tag = 'input window, operand 1, single buffered']
    #allocation6 [shape = 's32[1]{0}', space=sflag, size = 0x4, scoped, tag = 'scoped memory for tpu_custom_call.1']
    #allocation7 [shape = 'u8[98304]{0}', space=vmem, size = 0x18000, scoped, tag = 'input window, operand 2, single buffered']
    #allocation8 [shape = 'u8[32768]{0}', space=vmem, size = 0x8000, scoped, tag = 'input window, operand 3, single buffered']
    #allocation9 [shape = 's32[1]{0}', space=sflag, size = 0x4, scoped, tag = 'scoped memory for tpu_custom_call.1']
    #allocation10 [shape = 'u8[32768]{0}', space=vmem, size = 0x8000, scoped, tag = 'input window, operand 4, single buffered']
    #allocation11 [shape = 'u8[32768]{0}', space=vmem, size = 0x8000, scoped, tag = 'input window, operand 5, single buffered']
    #allocation12 [shape = 's32[1]{0}', space=sflag, size = 0x4, scoped, tag = 'scoped memory for tpu_custom_call.1']
    #allocation13 [shape = 'u8[32768]{0}', space=vmem, size = 0x8000, scoped, tag = 'input window, operand 6, single buffered']
    #allocation14 [shape = 'u8[4096]{0}', space=vmem, size = 0x1000, scoped, tag = 'output window, operand 0, single buffered']
    %12 = vsyncpa [#allocation3], 0
    %13 = vsyncpa [#allocation6], 0
    %14 = vsyncpa [#allocation9], 0
    %15 = vsyncpa [#allocation12], 0
    %16 = vsyncpa [#allocation4], 0
    // Predicated region
    $region2: #{tpu_custom_call.1} parent=1 // pred_check
      _
    $region3: #{tpu_custom_call.1} parent=1 // pred_check_branch
      %18 = sbr.rel (0) target = $region5
    $region4: #{tpu_custom_call.1} parent=1 // pred_region
      %s20 = ssub.s32 384, 384
      %21 = vsyncadd [#allocation3], %s20
      %s23 = sshll.u32 [#allocation2], 4
      %s24 = int_to_ptr.vmem [resolvable:$true] %s23
      %26 = dma.hbm_to_vmem [thread:$0]  %s0, 384, %s24, [#allocation3]
    $region5: #{tpu_custom_call.1} parent=1 // pred_fallthru
      _
    // Predicated region
    $region6: #{tpu_custom_call.1} parent=1 // pred_check
      _
    $region7: #{tpu_custom_call.1} parent=1 // pred_check_branch
      %28 = sbr.rel (0) target = $region9
    $region8: #{tpu_custom_call.1} parent=1 // pred_region
      %s30 = ssub.s32 128, 128
      %31 = vsyncadd [#allocation6], %s30
      %s33 = sshll.u32 [#allocation5], 4
      %s34 = int_to_ptr.vmem [resolvable:$true] %s33
      %36 = dma.hbm_to_vmem [thread:$0]  %s1, 128, %s34, [#allocation6]
    $region9: #{tpu_custom_call.1} parent=1 // pred_fallthru
      _
    // Predicated region
    $region10: #{tpu_custom_call.1} parent=1 // pred_check
      _
    $region11: #{tpu_custom_call.1} parent=1 // pred_check_branch
      %38 = sbr.rel (0) target = $region13
    $region12: #{tpu_custom_call.1} parent=1 // pred_region
      %s40 = ssub.s32 3072, 3072
      %41 = vsyncadd [#allocation6], %s40
      %s42 = sshll.u32 [#allocation7], 4
      %s43 = int_to_ptr.vmem [resolvable:$true] %s42
      %48 = dma.hbm_to_vmem [thread:$0]  %s2, 3072, %s43, [#allocation6], 64, 64, 4
    $region13: #{tpu_custom_call.1} parent=1 // pred_fallthru
      _
    // Predicated region
    $region14: #{tpu_custom_call.1} parent=1 // pred_check
      _
    $region15: #{tpu_custom_call.1} parent=1 // pred_check_branch
      %50 = sbr.rel (0) target = $region17
    $region16: #{tpu_custom_call.1} parent=1 // pred_region
      %s52 = ssub.s32 1024, 1024
      %53 = vsyncadd [#allocation9], %s52
      %s54 = sshll.u32 [#allocation8], 4
      %s55 = int_to_ptr.vmem [resolvable:$true] %s54
      %60 = dma.hbm_to_vmem [thread:$0]  %s3, 1024, %s55, [#allocation9], 64, 64, 4
    $region17: #{tpu_custom_call.1} parent=1 // pred_fallthru
      _
    // Predicated region
    $region18: #{tpu_custom_call.1} parent=1 // pred_check
      _
    $region19: #{tpu_custom_call.1} parent=1 // pred_check_branch
      %62 = sbr.rel (0) target = $region21
    $region20: #{tpu_custom_call.1} parent=1 // pred_region
      %s64 = ssub.s32 1024, 1024
      %65 = vsyncadd [#allocation9], %s64
      %s66 = sshll.u32 [#allocation10], 4
      %s67 = int_to_ptr.vmem [resolvable:$true] %s66
      %72 = dma.hbm_to_vmem [thread:$0]  %s4, 1024, %s67, [#allocation9], 64, 64, 4
    $region21: #{tpu_custom_call.1} parent=1 // pred_fallthru
      _
    // Predicated region
    $region22: #{tpu_custom_call.1} parent=1 // pred_check
      _
    $region23: #{tpu_custom_call.1} parent=1 // pred_check_branch
      %74 = sbr.rel (0) target = $region25
    $region24: #{tpu_custom_call.1} parent=1 // pred_region
      %s76 = ssub.s32 1024, 1024
      %77 = vsyncadd [#allocation12], %s76
      %s78 = sshll.u32 [#allocation11], 4
      %s79 = int_to_ptr.vmem [resolvable:$true] %s78
      %84 = dma.hbm_to_vmem [thread:$0]  %s5, 1024, %s79, [#allocation12], 64, 64, 4
    $region25: #{tpu_custom_call.1} parent=1 // pred_fallthru
      _
    // Predicated region
    $region26: #{tpu_custom_call.1} parent=1 // pred_check
      _
    $region27: #{tpu_custom_call.1} parent=1 // pred_check_branch
      %86 = sbr.rel (0) target = $region29
    $region28: #{tpu_custom_call.1} parent=1 // pred_region
      %s88 = ssub.s32 1024, 1024
      %89 = vsyncadd [#allocation12], %s88
      %s90 = sshll.u32 [#allocation13], 4
      %s91 = int_to_ptr.vmem [resolvable:$true] %s90
      %96 = dma.hbm_to_vmem [thread:$0]  %s6, 1024, %s91, [#allocation12], 64, 64, 4
    $region29: #{tpu_custom_call.1} parent=1 // pred_fallthru
      _
    // Predicated region
    $region30: #{tpu_custom_call.1} parent=1 // pred_check
      _
    $region31: #{tpu_custom_call.1} parent=1 // pred_check_branch
      %98 = sbr.rel (0) target = $region33
    $region32: #{tpu_custom_call.1} parent=1 // pred_region
      %99 = dma.done [#allocation3], 384
    $region33: #{tpu_custom_call.1} parent=1 // pred_fallthru
      _
    // Predicated region
    $region34: #{tpu_custom_call.1} parent=1 // pred_check
      _
    $region35: #{tpu_custom_call.1} parent=1 // pred_check_branch
      %101 = sbr.rel (0) target = $region37
    $region36: #{tpu_custom_call.1} parent=1 // pred_region
      %102 = dma.done [#allocation6], 128
    $region37: #{tpu_custom_call.1} parent=1 // pred_fallthru
      _
    // Predicated region
    $region38: #{tpu_custom_call.1} parent=1 // pred_check
      _
    $region39: #{tpu_custom_call.1} parent=1 // pred_check_branch
      %104 = sbr.rel (0) target = $region41
    $region40: #{tpu_custom_call.1} parent=1 // pred_region
      %105 = dma.done [#allocation6], 3072
    $region41: #{tpu_custom_call.1} parent=1 // pred_fallthru
      _
    // Predicated region
    $region42: #{tpu_custom_call.1} parent=1 // pred_check
      _
    $region43: #{tpu_custom_call.1} parent=1 // pred_check_branch
      %107 = sbr.rel (0) target = $region45
    $region44: #{tpu_custom_call.1} parent=1 // pred_region
      %108 = dma.done [#allocation9], 1024
    $region45: #{tpu_custom_call.1} parent=1 // pred_fallthru
      _
    // Predicated region
    $region46: #{tpu_custom_call.1} parent=1 // pred_check
      _
    $region47: #{tpu_custom_call.1} parent=1 // pred_check_branch
      %110 = sbr.rel (0) target = $region49
    $region48: #{tpu_custom_call.1} parent=1 // pred_region
      %111 = dma.done [#allocation9], 1024
    $region49: #{tpu_custom_call.1} parent=1 // pred_fallthru
      _
    // Predicated region
    $region50: #{tpu_custom_call.1} parent=1 // pred_check
      _
    $region51: #{tpu_custom_call.1} parent=1 // pred_check_branch
      %113 = sbr.rel (0) target = $region53
    $region52: #{tpu_custom_call.1} parent=1 // pred_region
      %114 = dma.done [#allocation12], 1024
    $region53: #{tpu_custom_call.1} parent=1 // pred_fallthru
      _
    // Predicated region
    $region54: #{tpu_custom_call.1} parent=1 // pred_check
      _
    $region55: #{tpu_custom_call.1} parent=1 // pred_check_branch
      %116 = sbr.rel (0) target = $region57
    $region56: #{tpu_custom_call.1} parent=1 // pred_region
      %117 = dma.done [#allocation12], 1024
    $region57: #{tpu_custom_call.1} parent=1 // pred_fallthru
      _
    %v119 = vld [vmem:[#allocation2] sm:$0xff]
    %v120 = vld [vmem:[#allocation2 + $0x8] sm:$0xff]
    %v121 = vld [vmem:[#allocation2 + $0x10] sm:$0xff]
    %v122 = vpack.c.bf16 %v119, %v119
    %v123 = vpack.c.bf16 %v120, %v120
    %v124 = vpack.c.bf16 %v121, %v121
    %v125 = vld [vmem:[#allocation7] sm:$0xf]
    %v126 = vld [vmem:[#allocation7 + $0x4] sm:$0xf]
    %v127 = vld [vmem:[#allocation7 + $0x8] sm:$0xf]
    %v128 = vld [vmem:[#allocation7 + $0xc] sm:$0xf]
    %v129 = vld [vmem:[#allocation7 + $0x10] sm:$0xf]
    %v130 = vld [vmem:[#allocation7 + $0x14] sm:$0xf]
    %v131 = vld [vmem:[#allocation7 + $0x18] sm:$0xf]
    %v132 = vld [vmem:[#allocation7 + $0x1c] sm:$0xf]
    %v133 = vld [vmem:[#allocation7 + $0x20] sm:$0xf]
    %v134 = vld [vmem:[#allocation7 + $0x24] sm:$0xf]
    %v135 = vld [vmem:[#allocation7 + $0x28] sm:$0xf]
    %v136 = vld [vmem:[#allocation7 + $0x2c] sm:$0xf]
    %v137 = vld [vmem:[#allocation7 + $0x30] sm:$0xf]
    %v138 = vld [vmem:[#allocation7 + $0x34] sm:$0xf]
    %v139 = vld [vmem:[#allocation7 + $0x38] sm:$0xf]
    %v140 = vld [vmem:[#allocation7 + $0x3c] sm:$0xf]
    %v141 = vld [vmem:[#allocation7 + $0x40] sm:$0xf]
    %v142 = vld [vmem:[#allocation7 + $0x44] sm:$0xf]
    %v143 = vld [vmem:[#allocation7 + $0x48] sm:$0xf]
    %v144 = vld [vmem:[#allocation7 + $0x4c] sm:$0xf]
    %v145 = vld [vmem:[#allocation7 + $0x50] sm:$0xf]
    %v146 = vld [vmem:[#allocation7 + $0x54] sm:$0xf]
    %v147 = vld [vmem:[#allocation7 + $0x58] sm:$0xf]
    %v148 = vld [vmem:[#allocation7 + $0x5c] sm:$0xf]
    %v149 = vld [vmem:[#allocation7 + $0x60] sm:$0xf]
    %v150 = vld [vmem:[#allocation7 + $0x64] sm:$0xf]
    %v151 = vld [vmem:[#allocation7 + $0x68] sm:$0xf]
    %v152 = vld [vmem:[#allocation7 + $0x6c] sm:$0xf]
    %v153 = vld [vmem:[#allocation7 + $0x70] sm:$0xf]
    %v154 = vld [vmem:[#allocation7 + $0x74] sm:$0xf]
    %v155 = vld [vmem:[#allocation7 + $0x78] sm:$0xf]
    %v156 = vld [vmem:[#allocation7 + $0x7c] sm:$0xf]
    %v157 = vld [vmem:[#allocation7 + $0x80] sm:$0xf]
    %v158 = vld [vmem:[#allocation7 + $0x84] sm:$0xf]
    %v159 = vld [vmem:[#allocation7 + $0x88] sm:$0xf]
    %v160 = vld [vmem:[#allocation7 + $0x8c] sm:$0xf]
    %v161 = vld [vmem:[#allocation7 + $0x90] sm:$0xf]
    %v162 = vld [vmem:[#allocation7 + $0x94] sm:$0xf]
    %v163 = vld [vmem:[#allocation7 + $0x98] sm:$0xf]
    %v164 = vld [vmem:[#allocation7 + $0x9c] sm:$0xf]
    %v165 = vld [vmem:[#allocation7 + $0xa0] sm:$0xf]
    %v166 = vld [vmem:[#allocation7 + $0xa4] sm:$0xf]
    %v167 = vld [vmem:[#allocation7 + $0xa8] sm:$0xf]
    %v168 = vld [vmem:[#allocation7 + $0xac] sm:$0xf]
    %v169 = vld [vmem:[#allocation7 + $0xb0] sm:$0xf]
    %v170 = vld [vmem:[#allocation7 + $0xb4] sm:$0xf]
    %v171 = vld [vmem:[#allocation7 + $0xb8] sm:$0xf]
    %v172 = vld [vmem:[#allocation7 + $0xbc] sm:$0xf]
    %v173 = vld [vmem:[#allocation5] sm:$0x1]
    %v174 = vlaneseq
    %v175 = vshrl.u32 %v174, 7
    %v176 = vsub.s32 0, %v175
    %v177 = vrot.slane %v173, %v176
    %v226 = vunpack.c.l.b16 %v125
    %v227 = vunpack.c.l.b16 %v126
    %v228 = vunpack.c.l.b16 %v127
    %v229 = vunpack.c.l.b16 %v128
    %v230 = vunpack.c.l.b16 %v129
    %v231 = vunpack.c.l.b16 %v130
    %v232 = vunpack.c.l.b16 %v131
    %v233 = vunpack.c.l.b16 %v132
    %v234 = vunpack.c.l.b16 %v133
    %v235 = vunpack.c.l.b16 %v134
    %v236 = vunpack.c.l.b16 %v135
    %v237 = vunpack.c.l.b16 %v136
    %v238 = vunpack.c.l.b16 %v137
    %v239 = vunpack.c.l.b16 %v138
    %v240 = vunpack.c.l.b16 %v139
    %v241 = vunpack.c.l.b16 %v140
    %v242 = vunpack.c.l.b16 %v141
    %v243 = vunpack.c.l.b16 %v142
    %v244 = vunpack.c.l.b16 %v143
    %v245 = vunpack.c.l.b16 %v144
    %v246 = vunpack.c.l.b16 %v145
    %v247 = vunpack.c.l.b16 %v146
    %v248 = vunpack.c.l.b16 %v147
    %v249 = vunpack.c.l.b16 %v148
    %v250 = vunpack.c.l.b16 %v149
    %v251 = vunpack.c.l.b16 %v150
    %v252 = vunpack.c.l.b16 %v151
    %v253 = vunpack.c.l.b16 %v152
    %v254 = vunpack.c.l.b16 %v153
    %v255 = vunpack.c.l.b16 %v154
    %v256 = vunpack.c.l.b16 %v155
    %v257 = vunpack.c.l.b16 %v156
    %v258 = vunpack.c.l.b16 %v157
    %v259 = vunpack.c.l.b16 %v158
    %v260 = vunpack.c.l.b16 %v159
    %v261 = vunpack.c.l.b16 %v160
    %v262 = vunpack.c.l.b16 %v161
    %v263 = vunpack.c.l.b16 %v162
    %v264 = vunpack.c.l.b16 %v163
    %v265 = vunpack.c.l.b16 %v164
    %v266 = vunpack.c.l.b16 %v165
    %v267 = vunpack.c.l.b16 %v166
    %v268 = vunpack.c.l.b16 %v167
    %v269 = vunpack.c.l.b16 %v168
    %v270 = vunpack.c.l.b16 %v169
    %v271 = vunpack.c.l.b16 %v170
    %v272 = vunpack.c.l.b16 %v171
    %v273 = vunpack.c.l.b16 %v172
    %v274 = vpack.c.b16 %v227, %v226
    %v275 = vpack.c.b16 %v229, %v228
    %v276 = vpack.c.b16 %v231, %v230
    %v277 = vpack.c.b16 %v233, %v232
    %v278 = vpack.c.b16 %v235, %v234
    %v279 = vpack.c.b16 %v237, %v236
    %v280 = vpack.c.b16 %v239, %v238
    %v281 = vpack.c.b16 %v241, %v240
    %v282 = vpack.c.b16 %v243, %v242
    %v283 = vpack.c.b16 %v245, %v244
    %v284 = vpack.c.b16 %v247, %v246
    %v285 = vpack.c.b16 %v249, %v248
    %v286 = vpack.c.b16 %v251, %v250
    %v287 = vpack.c.b16 %v253, %v252
    %v288 = vpack.c.b16 %v255, %v254
    %v289 = vpack.c.b16 %v257, %v256
    %v290 = vpack.c.b16 %v259, %v258
    %v291 = vpack.c.b16 %v261, %v260
    %v292 = vpack.c.b16 %v263, %v262
    %v293 = vpack.c.b16 %v265, %v264
    %v294 = vpack.c.b16 %v267, %v266
    %v295 = vpack.c.b16 %v269, %v268
    %v296 = vpack.c.b16 %v271, %v270
    %v297 = vpack.c.b16 %v273, %v272
    %322 = vmatprep.subr.bf16.mxu0 0
    %323 = vmatpush1.bf16.msra.mxu0 %v281
    %324 = vmatprep.subr.bf16.mxu0 0
    %325 = vmatpush1.bf16.msra.mxu0 %v280
    %326 = vmatprep.subr.bf16.mxu0 0
    %327 = vmatpush1.bf16.msra.mxu0 %v279
    %328 = vmatprep.subr.bf16.mxu0 0
    %329 = vmatpush1.bf16.msra.mxu0 %v278
    %330 = vmatprep.subr.bf16.mxu0 0
    %331 = vmatpush1.bf16.msra.mxu0 %v277
    %332 = vmatprep.subr.bf16.mxu0 0
    %333 = vmatpush1.bf16.msra.mxu0 %v276
    %334 = vmatprep.subr.bf16.mxu0 0
    %335 = vmatpush1.bf16.msra.mxu0 %v275
    %336 = vmatprep.subr.bf16.mxu0 0
    %337 = vmatpush1.bf16.msra.mxu0 %v274
    %338 = vmatprep.subr.bf16.mxu0 0
    %339 = vmatpush2.bf16.msra.mxu0 %v289
    %340 = vmatprep.subr.bf16.mxu0 0
    %341 = vmatpush2.bf16.msra.mxu0 %v288
    %342 = vmatprep.subr.bf16.mxu0 0
    %343 = vmatpush2.bf16.msra.mxu0 %v287
    %344 = vmatprep.subr.bf16.mxu0 0
    %345 = vmatpush2.bf16.msra.mxu0 %v286
    %346 = vmatprep.subr.bf16.mxu0 0
    %347 = vmatpush2.bf16.msra.mxu0 %v285
    %348 = vmatprep.subr.bf16.mxu0 0
    %349 = vmatpush2.bf16.msra.mxu0 %v284
    %350 = vmatprep.subr.bf16.mxu0 0
    %351 = vmatpush2.bf16.msra.mxu0 %v283
    %352 = vmatprep.subr.bf16.mxu0 0
    %353 = vmatpush2.bf16.msra.mxu0 %v282
    %354 = vmatprep.mubr.bf16.mxu0 %v123
    %355 = vmatmul.mubr.bf16.gmra.mxu0 %v122
    %v356 = vpop.f32.mrf.mxu0
    %v357 = vadd.f32 %v177, %v356
    %v358 = vpop.f32.mrf.mxu0
    %v359 = vpop.f32.mrf.mxu0
    %v360 = vpop.f32.mrf.mxu0
    %361 = vdwg.mxu0
    %362 = vmatprep.subr.bf16.mxu0 0
    %363 = vmatpush1.bf16.msra.mxu0 %v297
    %364 = vmatprep.subr.bf16.mxu0 0
    %365 = vmatpush1.bf16.msra.mxu0 %v296
    %366 = vmatprep.subr.bf16.mxu0 0
    %367 = vmatpush1.bf16.msra.mxu0 %v295
    %368 = vmatprep.subr.bf16.mxu0 0
    %369 = vmatpush1.bf16.msra.mxu0 %v294
    %370 = vmatprep.subr.bf16.mxu0 0
    %371 = vmatpush1.bf16.msra.mxu0 %v293
    %372 = vmatprep.subr.bf16.mxu0 0
    %373 = vmatpush1.bf16.msra.mxu0 %v292
    %374 = vmatprep.subr.bf16.mxu0 0
    %375 = vmatpush1.bf16.msra.mxu0 %v291
    %376 = vmatprep.subr.bf16.mxu0 0
    %377 = vmatpush1.bf16.msra.mxu0 %v290
    %378 = vmatprep.subr.bf16.mxu0 0
    %379 = vmatpush2.bf16.msra.mxu0 0
    %380 = vmatprep.subr.bf16.mxu0 0
    %381 = vmatpush2.bf16.msra.mxu0 0
    %382 = vmatprep.subr.bf16.mxu0 0
    %383 = vmatpush2.bf16.msra.mxu0 0
    %384 = vmatprep.subr.bf16.mxu0 0
    %385 = vmatpush2.bf16.msra.mxu0 0
    %386 = vmatprep.subr.bf16.mxu0 0
    %387 = vmatpush2.bf16.msra.mxu0 0
    %388 = vmatprep.subr.bf16.mxu0 0
    %389 = vmatpush2.bf16.msra.mxu0 0
    %390 = vmatprep.subr.bf16.mxu0 0
    %391 = vmatpush2.bf16.msra.mxu0 0
    %392 = vmatprep.subr.bf16.mxu0 0
    %393 = vmatpush2.bf16.msra.mxu0 0
    %394 = vmatprep.mubr.bf16.mxu0 0
    %395 = vmatmul.mubr.bf16.gmra.mxu0 %v124
    %v396 = vpop.f32.mrf.mxu0
    %v397 = vadd.f32 %v357, %v396
    %v398 = vpop.f32.mrf.mxu0
    %v399 = vpop.f32.mrf.mxu0
    %v400 = vpop.f32.mrf.mxu0
    %401 = vdwg.mxu0
    %v402 = vmax.f32 %v397, 0.0
    %v403 = vpack.c.bf16 %v402, %v402
    %v404 = vld [vmem:[#allocation8] sm:$0xf]
    %v405 = vld [vmem:[#allocation8 + $0x4] sm:$0xf]
    %v406 = vld [vmem:[#allocation8 + $0x8] sm:$0xf]
    %v407 = vld [vmem:[#allocation8 + $0xc] sm:$0xf]
    %v408 = vld [vmem:[#allocation8 + $0x10] sm:$0xf]
    %v409 = vld [vmem:[#allocation8 + $0x14] sm:$0xf]
    %v410 = vld [vmem:[#allocation8 + $0x18] sm:$0xf]
    %v411 = vld [vmem:[#allocation8 + $0x1c] sm:$0xf]
    %v412 = vld [vmem:[#allocation8 + $0x20] sm:$0xf]
    %v413 = vld [vmem:[#allocation8 + $0x24] sm:$0xf]
    %v414 = vld [vmem:[#allocation8 + $0x28] sm:$0xf]
    %v415 = vld [vmem:[#allocation8 + $0x2c] sm:$0xf]
    %v416 = vld [vmem:[#allocation8 + $0x30] sm:$0xf]
    %v417 = vld [vmem:[#allocation8 + $0x34] sm:$0xf]
    %v418 = vld [vmem:[#allocation8 + $0x38] sm:$0xf]
    %v419 = vld [vmem:[#allocation8 + $0x3c] sm:$0xf]
    %v420 = vld [vmem:[#allocation5 + $0x1] sm:$0x1]
    %v421 = vlaneseq
    %v422 = vshrl.u32 %v421, 7
    %v423 = vsub.s32 0, %v422
    %v424 = vrot.slane %v420, %v423
    %v441 = vunpack.c.l.b16 %v404
    %v442 = vunpack.c.l.b16 %v405
    %v443 = vunpack.c.l.b16 %v406
    %v444 = vunpack.c.l.b16 %v407
    %v445 = vunpack.c.l.b16 %v408
    %v446 = vunpack.c.l.b16 %v409
    %v447 = vunpack.c.l.b16 %v410
    %v448 = vunpack.c.l.b16 %v411
    %v449 = vunpack.c.l.b16 %v412
    %v450 = vunpack.c.l.b16 %v413
    %v451 = vunpack.c.l.b16 %v414
    %v452 = vunpack.c.l.b16 %v415
    %v453 = vunpack.c.l.b16 %v416
    %v454 = vunpack.c.l.b16 %v417
    %v455 = vunpack.c.l.b16 %v418
    %v456 = vunpack.c.l.b16 %v419
    %v457 = vpack.c.b16 %v442, %v441
    %v458 = vpack.c.b16 %v444, %v443
    %v459 = vpack.c.b16 %v446, %v445
    %v460 = vpack.c.b16 %v448, %v447
    %v461 = vpack.c.b16 %v450, %v449
    %v462 = vpack.c.b16 %v452, %v451
    %v463 = vpack.c.b16 %v454, %v453
    %v464 = vpack.c.b16 %v456, %v455
    %473 = vmatprep.subr.bf16.mxu0 0
    %474 = vmatpush1.bf16.msra.mxu0 %v464
    %475 = vmatprep.subr.bf16.mxu0 0
    %476 = vmatpush1.bf16.msra.mxu0 %v463
    %477 = vmatprep.subr.bf16.mxu0 0
    %478 = vmatpush1.bf16.msra.mxu0 %v462
    %479 = vmatprep.subr.bf16.mxu0 0
    %480 = vmatpush1.bf16.msra.mxu0 %v461
    %481 = vmatprep.subr.bf16.mxu0 0
    %482 = vmatpush1.bf16.msra.mxu0 %v460
    %483 = vmatprep.subr.bf16.mxu0 0
    %484 = vmatpush1.bf16.msra.mxu0 %v459
    %485 = vmatprep.subr.bf16.mxu0 0
    %486 = vmatpush1.bf16.msra.mxu0 %v458
    %487 = vmatprep.subr.bf16.mxu0 0
    %488 = vmatpush1.bf16.msra.mxu0 %v457
    %489 = vmatprep.subr.bf16.mxu0 0
    %490 = vmatpush2.bf16.msra.mxu0 0
    %491 = vmatprep.subr.bf16.mxu0 0
    %492 = vmatpush2.bf16.msra.mxu0 0
    %493 = vmatprep.subr.bf16.mxu0 0
    %494 = vmatpush2.bf16.msra.mxu0 0
    %495 = vmatprep.subr.bf16.mxu0 0
    %496 = vmatpush2.bf16.msra.mxu0 0
    %497 = vmatprep.subr.bf16.mxu0 0
    %498 = vmatpush2.bf16.msra.mxu0 0
    %499 = vmatprep.subr.bf16.mxu0 0
    %500 = vmatpush2.bf16.msra.mxu0 0
    %501 = vmatprep.subr.bf16.mxu0 0
    %502 = vmatpush2.bf16.msra.mxu0 0
    %503 = vmatprep.subr.bf16.mxu0 0
    %504 = vmatpush2.bf16.msra.mxu0 0
    %505 = vmatprep.mubr.bf16.mxu0 0
    %506 = vmatmul.mubr.bf16.gmra.mxu0 %v403
    %v507 = vpop.f32.mrf.mxu0
    %v508 = vadd.f32 %v424, %v507
    %v509 = vpop.f32.mrf.mxu0
    %v510 = vpop.f32.mrf.mxu0
    %v511 = vpop.f32.mrf.mxu0
    %512 = vdwg.mxu0
    %v513 = vmax.f32 %v508, 0.0
    %v514 = vpack.c.bf16 %v513, %v513
    %v515 = vld [vmem:[#allocation10] sm:$0xf]
    %v516 = vld [vmem:[#allocation10 + $0x4] sm:$0xf]
    %v517 = vld [vmem:[#allocation10 + $0x8] sm:$0xf]
    %v518 = vld [vmem:[#allocation10 + $0xc] sm:$0xf]
    %v519 = vld [vmem:[#allocation10 + $0x10] sm:$0xf]
    %v520 = vld [vmem:[#allocation10 + $0x14] sm:$0xf]
    %v521 = vld [vmem:[#allocation10 + $0x18] sm:$0xf]
    %v522 = vld [vmem:[#allocation10 + $0x1c] sm:$0xf]
    %v523 = vld [vmem:[#allocation10 + $0x20] sm:$0xf]
    %v524 = vld [vmem:[#allocation10 + $0x24] sm:$0xf]
    %v525 = vld [vmem:[#allocation10 + $0x28] sm:$0xf]
    %v526 = vld [vmem:[#allocation10 + $0x2c] sm:$0xf]
    %v527 = vld [vmem:[#allocation10 + $0x30] sm:$0xf]
    %v528 = vld [vmem:[#allocation10 + $0x34] sm:$0xf]
    %v529 = vld [vmem:[#allocation10 + $0x38] sm:$0xf]
    %v530 = vld [vmem:[#allocation10 + $0x3c] sm:$0xf]
    %v531 = vld [vmem:[#allocation5 + $0x2] sm:$0x1]
    %v532 = vlaneseq
    %v533 = vshrl.u32 %v532, 7
    %v534 = vsub.s32 0, %v533
    %v535 = vrot.slane %v531, %v534
    %v552 = vunpack.c.l.b16 %v515
    %v553 = vunpack.c.l.b16 %v516
    %v554 = vunpack.c.l.b16 %v517
    %v555 = vunpack.c.l.b16 %v518
    %v556 = vunpack.c.l.b16 %v519
    %v557 = vunpack.c.l.b16 %v520
    %v558 = vunpack.c.l.b16 %v521
    %v559 = vunpack.c.l.b16 %v522
    %v560 = vunpack.c.l.b16 %v523
    %v561 = vunpack.c.l.b16 %v524
    %v562 = vunpack.c.l.b16 %v525
    %v563 = vunpack.c.l.b16 %v526
    %v564 = vunpack.c.l.b16 %v527
    %v565 = vunpack.c.l.b16 %v528
    %v566 = vunpack.c.l.b16 %v529
    %v567 = vunpack.c.l.b16 %v530
    %v568 = vpack.c.b16 %v553, %v552
    %v569 = vpack.c.b16 %v555, %v554
    %v570 = vpack.c.b16 %v557, %v556
    %v571 = vpack.c.b16 %v559, %v558
    %v572 = vpack.c.b16 %v561, %v560
    %v573 = vpack.c.b16 %v563, %v562
    %v574 = vpack.c.b16 %v565, %v564
    %v575 = vpack.c.b16 %v567, %v566
    %584 = vmatprep.subr.bf16.mxu0 0
    %585 = vmatpush1.bf16.msra.mxu0 %v575
    %586 = vmatprep.subr.bf16.mxu0 0
    %587 = vmatpush1.bf16.msra.mxu0 %v574
    %588 = vmatprep.subr.bf16.mxu0 0
    %589 = vmatpush1.bf16.msra.mxu0 %v573
    %590 = vmatprep.subr.bf16.mxu0 0
    %591 = vmatpush1.bf16.msra.mxu0 %v572
    %592 = vmatprep.subr.bf16.mxu0 0
    %593 = vmatpush1.bf16.msra.mxu0 %v571
    %594 = vmatprep.subr.bf16.mxu0 0
    %595 = vmatpush1.bf16.msra.mxu0 %v570
    %596 = vmatprep.subr.bf16.mxu0 0
    %597 = vmatpush1.bf16.msra.mxu0 %v569
    %598 = vmatprep.subr.bf16.mxu0 0
    %599 = vmatpush1.bf16.msra.mxu0 %v568
    %600 = vmatprep.subr.bf16.mxu0 0
    %601 = vmatpush2.bf16.msra.mxu0 0
    %602 = vmatprep.subr.bf16.mxu0 0
    %603 = vmatpush2.bf16.msra.mxu0 0
    %604 = vmatprep.subr.bf16.mxu0 0
    %605 = vmatpush2.bf16.msra.mxu0 0
    %606 = vmatprep.subr.bf16.mxu0 0
    %607 = vmatpush2.bf16.msra.mxu0 0
    %608 = vmatprep.subr.bf16.mxu0 0
    %609 = vmatpush2.bf16.msra.mxu0 0
    %610 = vmatprep.subr.bf16.mxu0 0
    %611 = vmatpush2.bf16.msra.mxu0 0
    %612 = vmatprep.subr.bf16.mxu0 0
    %613 = vmatpush2.bf16.msra.mxu0 0
    %614 = vmatprep.subr.bf16.mxu0 0
    %615 = vmatpush2.bf16.msra.mxu0 0
    %616 = vmatprep.mubr.bf16.mxu0 0
    %617 = vmatmul.mubr.bf16.gmra.mxu0 %v514
    %v618 = vpop.f32.mrf.mxu0
    %v619 = vadd.f32 %v535, %v618
    %v620 = vpop.f32.mrf.mxu0
    %v621 = vpop.f32.mrf.mxu0
    %v622 = vpop.f32.mrf.mxu0
    %623 = vdwg.mxu0
    %v624 = vmax.f32 %v619, 0.0
    %v625 = vpack.c.bf16 %v624, %v624
    %v626 = vld [vmem:[#allocation11] sm:$0xf]
    %v627 = vld [vmem:[#allocation11 + $0x4] sm:$0xf]
    %v628 = vld [vmem:[#allocation11 + $0x8] sm:$0xf]
    %v629 = vld [vmem:[#allocation11 + $0xc] sm:$0xf]
    %v630 = vld [vmem:[#allocation11 + $0x10] sm:$0xf]
    %v631 = vld [vmem:[#allocation11 + $0x14] sm:$0xf]
    %v632 = vld [vmem:[#allocation11 + $0x18] sm:$0xf]
    %v633 = vld [vmem:[#allocation11 + $0x1c] sm:$0xf]
    %v634 = vld [vmem:[#allocation11 + $0x20] sm:$0xf]
    %v635 = vld [vmem:[#allocation11 + $0x24] sm:$0xf]
    %v636 = vld [vmem:[#allocation11 + $0x28] sm:$0xf]
    %v637 = vld [vmem:[#allocation11 + $0x2c] sm:$0xf]
    %v638 = vld [vmem:[#allocation11 + $0x30] sm:$0xf]
    %v639 = vld [vmem:[#allocation11 + $0x34] sm:$0xf]
    %v640 = vld [vmem:[#allocation11 + $0x38] sm:$0xf]
    %v641 = vld [vmem:[#allocation11 + $0x3c] sm:$0xf]
    %v642 = vld [vmem:[#allocation5 + $0x3] sm:$0x1]
    %v643 = vlaneseq
    %v644 = vshrl.u32 %v643, 7
    %v645 = vsub.s32 0, %v644
    %v646 = vrot.slane %v642, %v645
    %v663 = vunpack.c.l.b16 %v626
    %v664 = vunpack.c.l.b16 %v627
    %v665 = vunpack.c.l.b16 %v628
    %v666 = vunpack.c.l.b16 %v629
    %v667 = vunpack.c.l.b16 %v630
    %v668 = vunpack.c.l.b16 %v631
    %v669 = vunpack.c.l.b16 %v632
    %v670 = vunpack.c.l.b16 %v633
    %v671 = vunpack.c.l.b16 %v634
    %v672 = vunpack.c.l.b16 %v635
    %v673 = vunpack.c.l.b16 %v636
    %v674 = vunpack.c.l.b16 %v637
    %v675 = vunpack.c.l.b16 %v638
    %v676 = vunpack.c.l.b16 %v639
    %v677 = vunpack.c.l.b16 %v640
    %v678 = vunpack.c.l.b16 %v641
    %v679 = vpack.c.b16 %v664, %v663
    %v680 = vpack.c.b16 %v666, %v665
    %v681 = vpack.c.b16 %v668, %v667
    %v682 = vpack.c.b16 %v670, %v669
    %v683 = vpack.c.b16 %v672, %v671
    %v684 = vpack.c.b16 %v674, %v673
    %v685 = vpack.c.b16 %v676, %v675
    %v686 = vpack.c.b16 %v678, %v677
    %695 = vmatprep.subr.bf16.mxu0 0
    %696 = vmatpush1.bf16.msra.mxu0 %v686
    %697 = vmatprep.subr.bf16.mxu0 0
    %698 = vmatpush1.bf16.msra.mxu0 %v685
    %699 = vmatprep.subr.bf16.mxu0 0
    %700 = vmatpush1.bf16.msra.mxu0 %v684
    %701 = vmatprep.subr.bf16.mxu0 0
    %702 = vmatpush1.bf16.msra.mxu0 %v683
    %703 = vmatprep.subr.bf16.mxu0 0
    %704 = vmatpush1.bf16.msra.mxu0 %v682
    %705 = vmatprep.subr.bf16.mxu0 0
    %706 = vmatpush1.bf16.msra.mxu0 %v681
    %707 = vmatprep.subr.bf16.mxu0 0
    %708 = vmatpush1.bf16.msra.mxu0 %v680
    %709 = vmatprep.subr.bf16.mxu0 0
    %710 = vmatpush1.bf16.msra.mxu0 %v679
    %711 = vmatprep.subr.bf16.mxu0 0
    %712 = vmatpush2.bf16.msra.mxu0 0
    %713 = vmatprep.subr.bf16.mxu0 0
    %714 = vmatpush2.bf16.msra.mxu0 0
    %715 = vmatprep.subr.bf16.mxu0 0
    %716 = vmatpush2.bf16.msra.mxu0 0
    %717 = vmatprep.subr.bf16.mxu0 0
    %718 = vmatpush2.bf16.msra.mxu0 0
    %719 = vmatprep.subr.bf16.mxu0 0
    %720 = vmatpush2.bf16.msra.mxu0 0
    %721 = vmatprep.subr.bf16.mxu0 0
    %722 = vmatpush2.bf16.msra.mxu0 0
    %723 = vmatprep.subr.bf16.mxu0 0
    %724 = vmatpush2.bf16.msra.mxu0 0
    %725 = vmatprep.subr.bf16.mxu0 0
    %726 = vmatpush2.bf16.msra.mxu0 0
    %727 = vmatprep.mubr.bf16.mxu0 0
    %728 = vmatmul.mubr.bf16.gmra.mxu0 %v625
    %v729 = vpop.f32.mrf.mxu0
    %v730 = vadd.f32 %v646, %v729
    %v731 = vpop.f32.mrf.mxu0
    %v732 = vpop.f32.mrf.mxu0
    %v733 = vpop.f32.mrf.mxu0
    %734 = vdwg.mxu0
    %v735 = vmax.f32 %v730, 0.0
    %v736 = vpack.c.bf16 %v735, %v735
    %v737 = vld [vmem:[#allocation13] sm:$0xf]
    %v738 = vld [vmem:[#allocation13 + $0x4] sm:$0xf]
    %v739 = vld [vmem:[#allocation13 + $0x8] sm:$0xf]
    %v740 = vld [vmem:[#allocation13 + $0xc] sm:$0xf]
    %v741 = vld [vmem:[#allocation13 + $0x10] sm:$0xf]
    %v742 = vld [vmem:[#allocation13 + $0x14] sm:$0xf]
    %v743 = vld [vmem:[#allocation13 + $0x18] sm:$0xf]
    %v744 = vld [vmem:[#allocation13 + $0x1c] sm:$0xf]
    %v745 = vld [vmem:[#allocation13 + $0x20] sm:$0xf]
    %v746 = vld [vmem:[#allocation13 + $0x24] sm:$0xf]
    %v747 = vld [vmem:[#allocation13 + $0x28] sm:$0xf]
    %v748 = vld [vmem:[#allocation13 + $0x2c] sm:$0xf]
    %v749 = vld [vmem:[#allocation13 + $0x30] sm:$0xf]
    %v750 = vld [vmem:[#allocation13 + $0x34] sm:$0xf]
    %v751 = vld [vmem:[#allocation13 + $0x38] sm:$0xf]
    %v752 = vld [vmem:[#allocation13 + $0x3c] sm:$0xf]
    %v753 = vld [vmem:[#allocation5 + $0x4] sm:$0x1]
    %v754 = vlaneseq
    %v755 = vshrl.u32 %v754, 7
    %v756 = vsub.s32 0, %v755
    %v757 = vrot.slane %v753, %v756
    %v774 = vunpack.c.l.b16 %v737
    %v775 = vunpack.c.l.b16 %v738
    %v776 = vunpack.c.l.b16 %v739
    %v777 = vunpack.c.l.b16 %v740
    %v778 = vunpack.c.l.b16 %v741
    %v779 = vunpack.c.l.b16 %v742
    %v780 = vunpack.c.l.b16 %v743
    %v781 = vunpack.c.l.b16 %v744
    %v782 = vunpack.c.l.b16 %v745
    %v783 = vunpack.c.l.b16 %v746
    %v784 = vunpack.c.l.b16 %v747
    %v785 = vunpack.c.l.b16 %v748
    %v786 = vunpack.c.l.b16 %v749
    %v787 = vunpack.c.l.b16 %v750
    %v788 = vunpack.c.l.b16 %v751
    %v789 = vunpack.c.l.b16 %v752
    %v790 = vpack.c.b16 %v775, %v774
    %v791 = vpack.c.b16 %v777, %v776
    %v792 = vpack.c.b16 %v779, %v778
    %v793 = vpack.c.b16 %v781, %v780
    %v794 = vpack.c.b16 %v783, %v782
    %v795 = vpack.c.b16 %v785, %v784
    %v796 = vpack.c.b16 %v787, %v786
    %v797 = vpack.c.b16 %v789, %v788
    %806 = vmatprep.subr.bf16.mxu0 0
    %807 = vmatpush1.bf16.msra.mxu0 %v797
    %808 = vmatprep.subr.bf16.mxu0 0
    %809 = vmatpush1.bf16.msra.mxu0 %v796
    %810 = vmatprep.subr.bf16.mxu0 0
    %811 = vmatpush1.bf16.msra.mxu0 %v795
    %812 = vmatprep.subr.bf16.mxu0 0
    %813 = vmatpush1.bf16.msra.mxu0 %v794
    %814 = vmatprep.subr.bf16.mxu0 0
    %815 = vmatpush1.bf16.msra.mxu0 %v793
    %816 = vmatprep.subr.bf16.mxu0 0
    %817 = vmatpush1.bf16.msra.mxu0 %v792
    %818 = vmatprep.subr.bf16.mxu0 0
    %819 = vmatpush1.bf16.msra.mxu0 %v791
    %820 = vmatprep.subr.bf16.mxu0 0
    %821 = vmatpush1.bf16.msra.mxu0 %v790
    %822 = vmatprep.subr.bf16.mxu0 0
    %823 = vmatpush2.bf16.msra.mxu0 0
    %824 = vmatprep.subr.bf16.mxu0 0
    %825 = vmatpush2.bf16.msra.mxu0 0
    %826 = vmatprep.subr.bf16.mxu0 0
    %827 = vmatpush2.bf16.msra.mxu0 0
    %828 = vmatprep.subr.bf16.mxu0 0
    %829 = vmatpush2.bf16.msra.mxu0 0
    %830 = vmatprep.subr.bf16.mxu0 0
    %831 = vmatpush2.bf16.msra.mxu0 0
    %832 = vmatprep.subr.bf16.mxu0 0
    %833 = vmatpush2.bf16.msra.mxu0 0
    %834 = vmatprep.subr.bf16.mxu0 0
    %835 = vmatpush2.bf16.msra.mxu0 0
    %836 = vmatprep.subr.bf16.mxu0 0
    %837 = vmatpush2.bf16.msra.mxu0 0
    %838 = vmatprep.mubr.bf16.mxu0 0
    %839 = vmatmul.mubr.bf16.gmra.mxu0 %v736
    %v840 = vpop.f32.mrf.mxu0
    %v841 = vadd.f32 %v757, %v840
    %v842 = vpop.f32.mrf.mxu0
    %v843 = vpop.f32.mrf.mxu0
    %v844 = vpop.f32.mrf.mxu0
    %845 = vdwg.mxu0
    %846 = vst [vmem:[#allocation14] sm:$0xff] %v841
    // Predicated region
    $region58: #{tpu_custom_call.1} parent=1 // pred_check
      _
    $region59: #{tpu_custom_call.1} parent=1 // pred_check_branch
      %848 = sbr.rel (0) target = $region61
    $region60: #{tpu_custom_call.1} parent=1 // pred_region
      %s850 = ssub.s32 128, 128
      %851 = vsyncadd [#allocation4], %s850
      %s853 = sshll.u32 [#allocation14], 4
      %s854 = int_to_ptr.vmem [resolvable:$true] %s853
      %856 = dma.vmem_to_hbm [thread:$0]  %s854, 128, %s7, [#allocation4]
    $region61: #{tpu_custom_call.1} parent=1 // pred_fallthru
      _
    // Predicated region
    $region62: #{tpu_custom_call.1} parent=1 // pred_check
      _
    $region63: #{tpu_custom_call.1} parent=1 // pred_check_branch
      %858 = sbr.rel (0) target = $region65
    $region64: #{tpu_custom_call.1} parent=1 // pred_region
      %859 = dma.done [#allocation4], 128
    $region65: #{tpu_custom_call.1} parent=1 // pred_fallthru
      _
    %860 = vsyncpa [#allocation3], 1
    %861 = vsyncpa [#allocation6], 1
    %862 = vsyncpa [#allocation9], 1
    %863 = vsyncpa [#allocation12], 1
    %864 = vsyncpa [#allocation4], 1

// kernel: tpu_custom_call.1
$region0: #{tpu_custom_call.1}
  #allocation0 [shape = 'u32[]', space=smem, size = 0x4, offset = 0x4, fixed_abs, tag = 'smem constant byte address 0x4 - core index']
  #allocation1 [shape = 'u32[144,128]{1,0:T(1,128)}', space=vmem, size = 0x12000, scoped, tag = 'internal scratch']
  %s0 = inlined_call_operand.hbm [shape: f32[8,384], index: 0, kind: input, shape index: {}]
  %s1 = inlined_call_operand.hbm [shape: f32[5,128], index: 1, kind: input, shape index: {}]
  %s2 = inlined_call_operand.hbm [shape: bf16[384,128], index: 2, kind: input, shape index: {}]
  %s3 = inlined_call_operand.hbm [shape: bf16[128,128], index: 3, kind: input, shape index: {}]
  %s4 = inlined_call_operand.hbm [shape: bf16[128,128], index: 4, kind: input, shape index: {}]
  %s5 = inlined_call_operand.hbm [shape: bf16[128,128], index: 5, kind: input, shape index: {}]
  %s6 = inlined_call_operand.hbm [shape: bf16[128,128], index: 6, kind: input, shape index: {}]
  %s7 = inlined_call_operand.hbm [shape: f32[8,128], index: 7, kind: output, shape index: {}]
  %s8 = sld [smem:[#allocation0]]
  $region66: #{tpu_custom_call.1} parent=0
    _
  %s10 = ssub.s32 1, %s8
  %s11 = scalar_select 0, %s10, %s8
  $region1: #{tpu_custom_call.1} parent=0
    #allocation2 [shape = 'u8[12288]{0}', space=vmem, size = 0x3000, scoped, tag = 'input window, operand 0, single buffered']
    #allocation3 [shape = 's32[1]{0}', space=sflag, size = 0x4, scoped, tag = 'scoped memory for tpu_custom_call.1']
    #allocation4 [shape = 's32[1]{0}', space=sflag, size = 0x4, scoped, tag = 'scoped memory for tpu_custom_call.1']
    #allocation5 [shape = 'u8[4096]{0}', space=vmem, size = 0x1000, scoped, tag = 'input window, operand 1, single buffered']
    #allocation6 [shape = 's32[1]{0}', space=sflag, size = 0x4, scoped, tag = 'scoped memory for tpu_custom_call.1']
    #allocation7 [shape = 'u8[98304]{0}', space=vmem, size = 0x18000, scoped, tag = 'input window, operand 2, single buffered']
    #allocation8 [shape = 'u8[32768]{0}', space=vmem, size = 0x8000, scoped, tag = 'input window, operand 3, single buffered']
    #allocation9 [shape = 's32[1]{0}', space=sflag, size = 0x4, scoped, tag = 'scoped memory for tpu_custom_call.1']
    #allocation10 [shape = 'u8[32768]{0}', space=vmem, size = 0x8000, scoped, tag = 'input window, operand 4, single buffered']
    #allocation11 [shape = 'u8[32768]{0}', space=vmem, size = 0x8000, scoped, tag = 'input window, operand 5, single buffered']
    #allocation12 [shape = 's32[1]{0}', space=sflag, size = 0x4, scoped, tag = 'scoped memory for tpu_custom_call.1']
    #allocation13 [shape = 'u8[32768]{0}', space=vmem, size = 0x8000, scoped, tag = 'input window, operand 6, single buffered']
    #allocation14 [shape = 'u8[4096]{0}', space=vmem, size = 0x1000, scoped, tag = 'output window, operand 0, single buffered']
    %12 = vsyncpa [#allocation3], 0
    %13 = vsyncpa [#allocation6], 0
    %14 = vsyncpa [#allocation9], 0
    %15 = vsyncpa [#allocation12], 0
    %16 = vsyncpa [#allocation4], 0
    // Predicated region
    $region2: #{tpu_custom_call.1} parent=1 // pred_check
      _
    $region3: #{tpu_custom_call.1} parent=1 // pred_check_branch
      %18 = sbr.rel (0) target = $region5
    $region4: #{tpu_custom_call.1} parent=1 // pred_region
      %s20 = ssub.s32 384, 384
      %21 = vsyncadd [#allocation3], %s20
      %s23 = sshll.u32 [#allocation2], 4
      %s24 = int_to_ptr.vmem [resolvable:$true] %s23
      %26 = dma.hbm_to_vmem [thread:$0]  %s0, 384, %s24, [#allocation3]
    $region5: #{tpu_custom_call.1} parent=1 // pred_fallthru
      _
    // Predicated region
    $region6: #{tpu_custom_call.1} parent=1 // pred_check
      _
    $region7: #{tpu_custom_call.1} parent=1 // pred_check_branch
      %28 = sbr.rel (0) target = $region9
    $region8: #{tpu_custom_call.1} parent=1 // pred_region
      %s30 = ssub.s32 128, 128
      %31 = vsyncadd [#allocation6], %s30
      %s33 = sshll.u32 [#allocation5], 4
      %s34 = int_to_ptr.vmem [resolvable:$true] %s33
      %36 = dma.hbm_to_vmem [thread:$0]  %s1, 128, %s34, [#allocation6]
    $region9: #{tpu_custom_call.1} parent=1 // pred_fallthru
      _
    // Predicated region
    $region10: #{tpu_custom_call.1} parent=1 // pred_check
      _
    $region11: #{tpu_custom_call.1} parent=1 // pred_check_branch
      %38 = sbr.rel (0) target = $region13
    $region12: #{tpu_custom_call.1} parent=1 // pred_region
      %s40 = ssub.s32 3072, 3072
      %41 = vsyncadd [#allocation6], %s40
      %s42 = sshll.u32 [#allocation7], 4
      %s43 = int_to_ptr.vmem [resolvable:$true] %s42
      %48 = dma.hbm_to_vmem [thread:$0]  %s2, 3072, %s43, [#allocation6], 64, 64, 4
    $region13: #{tpu_custom_call.1} parent=1 // pred_fallthru
      _
    // Predicated region
    $region14: #{tpu_custom_call.1} parent=1 // pred_check
      _
    $region15: #{tpu_custom_call.1} parent=1 // pred_check_branch
      %50 = sbr.rel (0) target = $region17
    $region16: #{tpu_custom_call.1} parent=1 // pred_region
      %s52 = ssub.s32 1024, 1024
      %53 = vsyncadd [#allocation9], %s52
      %s54 = sshll.u32 [#allocation8], 4
      %s55 = int_to_ptr.vmem [resolvable:$true] %s54
      %60 = dma.hbm_to_vmem [thread:$0]  %s3, 1024, %s55, [#allocation9], 64, 64, 4
    $region17: #{tpu_custom_call.1} parent=1 // pred_fallthru
      _
    // Predicated region
    $region18: #{tpu_custom_call.1} parent=1 // pred_check
      _
    $region19: #{tpu_custom_call.1} parent=1 // pred_check_branch
      %62 = sbr.rel (0) target = $region21
    $region20: #{tpu_custom_call.1} parent=1 // pred_region
      %s64 = ssub.s32 1024, 1024
      %65 = vsyncadd [#allocation9], %s64
      %s66 = sshll.u32 [#allocation10], 4
      %s67 = int_to_ptr.vmem [resolvable:$true] %s66
      %72 = dma.hbm_to_vmem [thread:$0]  %s4, 1024, %s67, [#allocation9], 64, 64, 4
    $region21: #{tpu_custom_call.1} parent=1 // pred_fallthru
      _
    // Predicated region
    $region22: #{tpu_custom_call.1} parent=1 // pred_check
      _
    $region23: #{tpu_custom_call.1} parent=1 // pred_check_branch
      %74 = sbr.rel (0) target = $region25
    $region24: #{tpu_custom_call.1} parent=1 // pred_region
      %s76 = ssub.s32 1024, 1024
      %77 = vsyncadd [#allocation12], %s76
      %s78 = sshll.u32 [#allocation11], 4
      %s79 = int_to_ptr.vmem [resolvable:$true] %s78
      %84 = dma.hbm_to_vmem [thread:$0]  %s5, 1024, %s79, [#allocation12], 64, 64, 4
    $region25: #{tpu_custom_call.1} parent=1 // pred_fallthru
      _
    // Predicated region
    $region26: #{tpu_custom_call.1} parent=1 // pred_check
      _
    $region27: #{tpu_custom_call.1} parent=1 // pred_check_branch
      %86 = sbr.rel (0) target = $region29
    $region28: #{tpu_custom_call.1} parent=1 // pred_region
      %s88 = ssub.s32 1024, 1024
      %89 = vsyncadd [#allocation12], %s88
      %s90 = sshll.u32 [#allocation13], 4
      %s91 = int_to_ptr.vmem [resolvable:$true] %s90
      %96 = dma.hbm_to_vmem [thread:$0]  %s6, 1024, %s91, [#allocation12], 64, 64, 4
    $region29: #{tpu_custom_call.1} parent=1 // pred_fallthru
      _
    // Predicated region
    $region30: #{tpu_custom_call.1} parent=1 // pred_check
      _
    $region31: #{tpu_custom_call.1} parent=1 // pred_check_branch
      %98 = sbr.rel (0) target = $region33
    $region32: #{tpu_custom_call.1} parent=1 // pred_region
      %99 = dma.done [#allocation3], 384
    $region33: #{tpu_custom_call.1} parent=1 // pred_fallthru
      _
    // Predicated region
    $region34: #{tpu_custom_call.1} parent=1 // pred_check
      _
    $region35: #{tpu_custom_call.1} parent=1 // pred_check_branch
      %101 = sbr.rel (0) target = $region37
    $region36: #{tpu_custom_call.1} parent=1 // pred_region
      %102 = dma.done [#allocation6], 128
    $region37: #{tpu_custom_call.1} parent=1 // pred_fallthru
      _
    // Predicated region
    $region38: #{tpu_custom_call.1} parent=1 // pred_check
      _
    $region39: #{tpu_custom_call.1} parent=1 // pred_check_branch
      %104 = sbr.rel (0) target = $region41
    $region40: #{tpu_custom_call.1} parent=1 // pred_region
      %105 = dma.done [#allocation6], 3072
    $region41: #{tpu_custom_call.1} parent=1 // pred_fallthru
      _
    // Predicated region
    $region42: #{tpu_custom_call.1} parent=1 // pred_check
      _
    $region43: #{tpu_custom_call.1} parent=1 // pred_check_branch
      %107 = sbr.rel (0) target = $region45
    $region44: #{tpu_custom_call.1} parent=1 // pred_region
      %108 = dma.done [#allocation9], 1024
    $region45: #{tpu_custom_call.1} parent=1 // pred_fallthru
      _
    // Predicated region
    $region46: #{tpu_custom_call.1} parent=1 // pred_check
      _
    $region47: #{tpu_custom_call.1} parent=1 // pred_check_branch
      %110 = sbr.rel (0) target = $region49
    $region48: #{tpu_custom_call.1} parent=1 // pred_region
      %111 = dma.done [#allocation9], 1024
    $region49: #{tpu_custom_call.1} parent=1 // pred_fallthru
      _
    // Predicated region
    $region50: #{tpu_custom_call.1} parent=1 // pred_check
      _
    $region51: #{tpu_custom_call.1} parent=1 // pred_check_branch
      %113 = sbr.rel (0) target = $region53
    $region52: #{tpu_custom_call.1} parent=1 // pred_region
      %114 = dma.done [#allocation12], 1024
    $region53: #{tpu_custom_call.1} parent=1 // pred_fallthru
      _
    // Predicated region
    $region54: #{tpu_custom_call.1} parent=1 // pred_check
      _
    $region55: #{tpu_custom_call.1} parent=1 // pred_check_branch
      %116 = sbr.rel (0) target = $region57
    $region56: #{tpu_custom_call.1} parent=1 // pred_region
      %117 = dma.done [#allocation12], 1024
    $region57: #{tpu_custom_call.1} parent=1 // pred_fallthru
      _
    %v119 = vld [vmem:[#allocation2] sm:$0xff]
    %v120 = vld [vmem:[#allocation2 + $0x8] sm:$0xff]
    %v121 = vld [vmem:[#allocation2 + $0x10] sm:$0xff]
    %v122 = vpack.c.bf16 %v119, %v119
    %v123 = vpack.c.bf16 %v120, %v120
    %v124 = vpack.c.bf16 %v121, %v121
    %v125 = vld [vmem:[#allocation7] sm:$0xf]
    %v126 = vld [vmem:[#allocation7 + $0x4] sm:$0xf]
    %v127 = vld [vmem:[#allocation7 + $0x8] sm:$0xf]
    %v128 = vld [vmem:[#allocation7 + $0xc] sm:$0xf]
    %v129 = vld [vmem:[#allocation7 + $0x10] sm:$0xf]
    %v130 = vld [vmem:[#allocation7 + $0x14] sm:$0xf]
    %v131 = vld [vmem:[#allocation7 + $0x18] sm:$0xf]
    %v132 = vld [vmem:[#allocation7 + $0x1c] sm:$0xf]
    %v133 = vld [vmem:[#allocation7 + $0x20] sm:$0xf]
    %v134 = vld [vmem:[#allocation7 + $0x24] sm:$0xf]
    %v135 = vld [vmem:[#allocation7 + $0x28] sm:$0xf]
    %v136 = vld [vmem:[#allocation7 + $0x2c] sm:$0xf]
    %v137 = vld [vmem:[#allocation7 + $0x30] sm:$0xf]
    %v138 = vld [vmem:[#allocation7 + $0x34] sm:$0xf]
    %v139 = vld [vmem:[#allocation7 + $0x38] sm:$0xf]
    %v140 = vld [vmem:[#allocation7 + $0x3c] sm:$0xf]
    %v141 = vld [vmem:[#allocation7 + $0x40] sm:$0xf]
    %v142 = vld [vmem:[#allocation7 + $0x44] sm:$0xf]
    %v143 = vld [vmem:[#allocation7 + $0x48] sm:$0xf]
    %v144 = vld [vmem:[#allocation7 + $0x4c] sm:$0xf]
    %v145 = vld [vmem:[#allocation7 + $0x50] sm:$0xf]
    %v146 = vld [vmem:[#allocation7 + $0x54] sm:$0xf]
    %v147 = vld [vmem:[#allocation7 + $0x58] sm:$0xf]
    %v148 = vld [vmem:[#allocation7 + $0x5c] sm:$0xf]
    %v149 = vld [vmem:[#allocation7 + $0x60] sm:$0xf]
    %v150 = vld [vmem:[#allocation7 + $0x64] sm:$0xf]
    %v151 = vld [vmem:[#allocation7 + $0x68] sm:$0xf]
    %v152 = vld [vmem:[#allocation7 + $0x6c] sm:$0xf]
    %v153 = vld [vmem:[#allocation7 + $0x70] sm:$0xf]
    %v154 = vld [vmem:[#allocation7 + $0x74] sm:$0xf]
    %v155 = vld [vmem:[#allocation7 + $0x78] sm:$0xf]
    %v156 = vld [vmem:[#allocation7 + $0x7c] sm:$0xf]
    %v157 = vld [vmem:[#allocation7 + $0x80] sm:$0xf]
    %v158 = vld [vmem:[#allocation7 + $0x84] sm:$0xf]
    %v159 = vld [vmem:[#allocation7 + $0x88] sm:$0xf]
    %v160 = vld [vmem:[#allocation7 + $0x8c] sm:$0xf]
    %v161 = vld [vmem:[#allocation7 + $0x90] sm:$0xf]
    %v162 = vld [vmem:[#allocation7 + $0x94] sm:$0xf]
    %v163 = vld [vmem:[#allocation7 + $0x98] sm:$0xf]
    %v164 = vld [vmem:[#allocation7 + $0x9c] sm:$0xf]
    %v165 = vld [vmem:[#allocation7 + $0xa0] sm:$0xf]
    %v166 = vld [vmem:[#allocation7 + $0xa4] sm:$0xf]
    %v167 = vld [vmem:[#allocation7 + $0xa8] sm:$0xf]
    %v168 = vld [vmem:[#allocation7 + $0xac] sm:$0xf]
    %v169 = vld [vmem:[#allocation7 + $0xb0] sm:$0xf]
    %v170 = vld [vmem:[#allocation7 + $0xb4] sm:$0xf]
    %v171 = vld [vmem:[#allocation7 + $0xb8] sm:$0xf]
    %v172 = vld [vmem:[#allocation7 + $0xbc] sm:$0xf]
    %v173 = vld [vmem:[#allocation5] sm:$0x1]
    %v174 = vlaneseq
    %v175 = vshrl.u32 %v174, 7
    %v176 = vsub.s32 0, %v175
    %v177 = vrot.slane %v173, %v176
    %v226 = vunpack.c.l.b16 %v125
    %v227 = vunpack.c.l.b16 %v126
    %v228 = vunpack.c.l.b16 %v127
    %v229 = vunpack.c.l.b16 %v128
    %v230 = vunpack.c.l.b16 %v129
    %v231 = vunpack.c.l.b16 %v130
    %v232 = vunpack.c.l.b16 %v131
    %v233 = vunpack.c.l.b16 %v132
    %v234 = vunpack.c.l.b16 %v133
    %v235 = vunpack.c.l.b16 %v134
    %v236 = vunpack.c.l.b16 %v135
    %v237 = vunpack.c.l.b16 %v136
    %v238 = vunpack.c.l.b16 %v137
    %v239 = vunpack.c.l.b16 %v138
    %v240 = vunpack.c.l.b16 %v139
    %v241 = vunpack.c.l.b16 %v140
    %v242 = vunpack.c.l.b16 %v141
    %v243 = vunpack.c.l.b16 %v142
    %v244 = vunpack.c.l.b16 %v143
    %v245 = vunpack.c.l.b16 %v144
    %v246 = vunpack.c.l.b16 %v145
    %v247 = vunpack.c.l.b16 %v146
    %v248 = vunpack.c.l.b16 %v147
    %v249 = vunpack.c.l.b16 %v148
    %v250 = vunpack.c.l.b16 %v149
    %v251 = vunpack.c.l.b16 %v150
    %v252 = vunpack.c.l.b16 %v151
    %v253 = vunpack.c.l.b16 %v152
    %v254 = vunpack.c.l.b16 %v153
    %v255 = vunpack.c.l.b16 %v154
    %v256 = vunpack.c.l.b16 %v155
    %v257 = vunpack.c.l.b16 %v156
    %v258 = vunpack.c.l.b16 %v157
    %v259 = vunpack.c.l.b16 %v158
    %v260 = vunpack.c.l.b16 %v159
    %v261 = vunpack.c.l.b16 %v160
    %v262 = vunpack.c.l.b16 %v161
    %v263 = vunpack.c.l.b16 %v162
    %v264 = vunpack.c.l.b16 %v163
    %v265 = vunpack.c.l.b16 %v164
    %v266 = vunpack.c.l.b16 %v165
    %v267 = vunpack.c.l.b16 %v166
    %v268 = vunpack.c.l.b16 %v167
    %v269 = vunpack.c.l.b16 %v168
    %v270 = vunpack.c.l.b16 %v169
    %v271 = vunpack.c.l.b16 %v170
    %v272 = vunpack.c.l.b16 %v171
    %v273 = vunpack.c.l.b16 %v172
    %v274 = vpack.c.b16 %v227, %v226
    %v275 = vpack.c.b16 %v229, %v228
    %v276 = vpack.c.b16 %v231, %v230
    %v277 = vpack.c.b16 %v233, %v232
    %v278 = vpack.c.b16 %v235, %v234
    %v279 = vpack.c.b16 %v237, %v236
    %v280 = vpack.c.b16 %v239, %v238
    %v281 = vpack.c.b16 %v241, %v240
    %v282 = vpack.c.b16 %v243, %v242
    %v283 = vpack.c.b16 %v245, %v244
    %v284 = vpack.c.b16 %v247, %v246
    %v285 = vpack.c.b16 %v249, %v248
    %v286 = vpack.c.b16 %v251, %v250
    %v287 = vpack.c.b16 %v253, %v252
    %v288 = vpack.c.b16 %v255, %v254
    %v289 = vpack.c.b16 %v257, %v256
    %v290 = vpack.c.b16 %v259, %v258
    %v291 = vpack.c.b16 %v261, %v260
    %v292 = vpack.c.b16 %v263, %v262
    %v293 = vpack.c.b16 %v265, %v264
    %v294 = vpack.c.b16 %v267, %v266
    %v295 = vpack.c.b16 %v269, %v268
    %v296 = vpack.c.b16 %v271, %v270
    %v297 = vpack.c.b16 %v273, %v272
    %322 = vmatprep.subr.bf16.mxu0 0
    %323 = vmatpush1.bf16.msra.mxu0 %v281
    %324 = vmatprep.subr.bf16.mxu0 0
    %325 = vmatpush1.bf16.msra.mxu0 %v280
    %326 = vmatprep.subr.bf16.mxu0 0
    %327 = vmatpush1.bf16.msra.mxu0 %v279
    %328 = vmatprep.subr.bf16.mxu0 0
    %329 = vmatpush1.bf16.msra.mxu0 %v278
    %330 = vmatprep.subr.bf16.mxu0 0
    %331 = vmatpush1.bf16.msra.mxu0 %v277
    %332 = vmatprep.subr.bf16.mxu0 0
    %333 = vmatpush1.bf16.msra.mxu0 %v276
    %334 = vmatprep.subr.bf16.mxu0 0
    %335 = vmatpush1.bf16.msra.mxu0 %v275
    %336 = vmatprep.subr.bf16.mxu0 0
    %337 = vmatpush1.bf16.msra.mxu0 %v274
    %338 = vmatprep.subr.bf16.mxu0 0
    %339 = vmatpush2.bf16.msra.mxu0 %v289
    %340 = vmatprep.subr.bf16.mxu0 0
    %341 = vmatpush2.bf16.msra.mxu0 %v288
    %342 = vmatprep.subr.bf16.mxu0 0
    %343 = vmatpush2.bf16.msra.mxu0 %v287
    %344 = vmatprep.subr.bf16.mxu0 0
    %345 = vmatpush2.bf16.msra.mxu0 %v286
    %346 = vmatprep.subr.bf16.mxu0 0
    %347 = vmatpush2.bf16.msra.mxu0 %v285
    %348 = vmatprep.subr.bf16.mxu0 0
    %349 = vmatpush2.bf16.msra.mxu0 %v284
    %350 = vmatprep.subr.bf16.mxu0 0
    %351 = vmatpush2.bf16.msra.mxu0 %v283
    %352 = vmatprep.subr.bf16.mxu0 0
    %353 = vmatpush2.bf16.msra.mxu0 %v282
    %354 = vmatprep.mubr.bf16.mxu0 %v123
    %355 = vmatmul.mubr.bf16.gmra.mxu0 %v122
    %v356 = vpop.f32.mrf.mxu0
    %v357 = vadd.f32 %v177, %v356
    %v358 = vpop.f32.mrf.mxu0
    %v359 = vpop.f32.mrf.mxu0
    %v360 = vpop.f32.mrf.mxu0
    %361 = vdwg.mxu0
    %362 = vmatprep.subr.bf16.mxu0 0
    %363 = vmatpush1.bf16.msra.mxu0 %v297
    %364 = vmatprep.subr.bf16.mxu0 0
    %365 = vmatpush1.bf16.msra.mxu0 %v296
    %366 = vmatprep.subr.bf16.mxu0 0
    %367 = vmatpush1.bf16.msra.mxu0 %v295
    %368 = vmatprep.subr.bf16.mxu0 0
    %369 = vmatpush1.bf16.msra.mxu0 %v294
    %370 = vmatprep.subr.bf16.mxu0 0
    %371 = vmatpush1.bf16.msra.mxu0 %v293
    %372 = vmatprep.subr.bf16.mxu0 0
    %373 = vmatpush1.bf16.msra.mxu0 %v292
    %374 = vmatprep.subr.bf16.mxu0 0
    %375 = vmatpush1.bf16.msra.mxu0 %v291
    %376 = vmatprep.subr.bf16.mxu0 0
    %377 = vmatpush1.bf16.msra.mxu0 %v290
    %378 = vmatprep.subr.bf16.mxu0 0
    %379 = vmatpush2.bf16.msra.mxu0 0
    %380 = vmatprep.subr.bf16.mxu0 0
    %381 = vmatpush2.bf16.msra.mxu0 0
    %382 = vmatprep.subr.bf16.mxu0 0
    %383 = vmatpush2.bf16.msra.mxu0 0
    %384 = vmatprep.subr.bf16.mxu0 0
    %385 = vmatpush2.bf16.msra.mxu0 0
    %386 = vmatprep.subr.bf16.mxu0 0
    %387 = vmatpush2.bf16.msra.mxu0 0
    %388 = vmatprep.subr.bf16.mxu0 0
    %389 = vmatpush2.bf16.msra.mxu0 0
    %390 = vmatprep.subr.bf16.mxu0 0
    %391 = vmatpush2.bf16.msra.mxu0 0
    %392 = vmatprep.subr.bf16.mxu0 0
    %393 = vmatpush2.bf16.msra.mxu0 0
    %394 = vmatprep.mubr.bf16.mxu0 0
    %395 = vmatmul.mubr.bf16.gmra.mxu0 %v124
    %v396 = vpop.f32.mrf.mxu0
    %v397 = vadd.f32 %v357, %v396
    %v398 = vpop.f32.mrf.mxu0
    %v399 = vpop.f32.mrf.mxu0
    %v400 = vpop.f32.mrf.mxu0
    %401 = vdwg.mxu0
    %v402 = vmax.f32 %v397, 0.0
    %v403 = vpack.c.bf16 %v402, %v402
    %v404 = vld [vmem:[#allocation8] sm:$0xf]
    %v405 = vld [vmem:[#allocation8 + $0x4] sm:$0xf]
    %v406 = vld [vmem:[#allocation8 + $0x8] sm:$0xf]
    %v407 = vld [vmem:[#allocation8 + $0xc] sm:$0xf]
    %v408 = vld [vmem:[#allocation8 + $0x10] sm:$0xf]
    %v409 = vld [vmem:[#allocation8 + $0x14] sm:$0xf]
    %v410 = vld [vmem:[#allocation8 + $0x18] sm:$0xf]
    %v411 = vld [vmem:[#allocation8 + $0x1c] sm:$0xf]
    %v412 = vld [vmem:[#allocation8 + $0x20] sm:$0xf]
    %v413 = vld [vmem:[#allocation8 + $0x24] sm:$0xf]
    %v414 = vld [vmem:[#allocation8 + $0x28] sm:$0xf]
    %v415 = vld [vmem:[#allocation8 + $0x2c] sm:$0xf]
    %v416 = vld [vmem:[#allocation8 + $0x30] sm:$0xf]
    %v417 = vld [vmem:[#allocation8 + $0x34] sm:$0xf]
    %v418 = vld [vmem:[#allocation8 + $0x38] sm:$0xf]
    %v419 = vld [vmem:[#allocation8 + $0x3c] sm:$0xf]
    %v420 = vld [vmem:[#allocation5 + $0x1] sm:$0x1]
    %v421 = vlaneseq
    %v422 = vshrl.u32 %v421, 7
    %v423 = vsub.s32 0, %v422
    %v424 = vrot.slane %v420, %v423
    %v441 = vunpack.c.l.b16 %v404
    %v442 = vunpack.c.l.b16 %v405
    %v443 = vunpack.c.l.b16 %v406
    %v444 = vunpack.c.l.b16 %v407
    %v445 = vunpack.c.l.b16 %v408
    %v446 = vunpack.c.l.b16 %v409
    %v447 = vunpack.c.l.b16 %v410
    %v448 = vunpack.c.l.b16 %v411
    %v449 = vunpack.c.l.b16 %v412
    %v450 = vunpack.c.l.b16 %v413
    %v451 = vunpack.c.l.b16 %v414
    %v452 = vunpack.c.l.b16 %v415
    %v453 = vunpack.c.l.b16 %v416
    %v454 = vunpack.c.l.b16 %v417
    %v455 = vunpack.c.l.b16 %v418
    %v456 = vunpack.c.l.b16 %v419
    %v457 = vpack.c.b16 %v442, %v441
    %v458 = vpack.c.b16 %v444, %v443
    %v459 = vpack.c.b16 %v446, %v445
    %v460 = vpack.c.b16 %v448, %v447
    %v461 = vpack.c.b16 %v450, %v449
    %v462 = vpack.c.b16 %v452, %v451
    %v463 = vpack.c.b16 %v454, %v453
    %v464 = vpack.c.b16 %v456, %v455
    %473 = vmatprep.subr.bf16.mxu0 0
    %474 = vmatpush1.bf16.msra.mxu0 %v464
    %475 = vmatprep.subr.bf16.mxu0 0
    %476 = vmatpush1.bf16.msra.mxu0 %v463
    %477 = vmatprep.subr.bf16.mxu0 0
    %478 = vmatpush1.bf16.msra.mxu0 %v462
    %479 = vmatprep.subr.bf16.mxu0 0
    %480 = vmatpush1.bf16.msra.mxu0 %v461
    %481 = vmatprep.subr.bf16.mxu0 0
    %482 = vmatpush1.bf16.msra.mxu0 %v460
    %483 = vmatprep.subr.bf16.mxu0 0
    %484 = vmatpush1.bf16.msra.mxu0 %v459
    %485 = vmatprep.subr.bf16.mxu0 0
    %486 = vmatpush1.bf16.msra.mxu0 %v458
    %487 = vmatprep.subr.bf16.mxu0 0
    %488 = vmatpush1.bf16.msra.mxu0 %v457
    %489 = vmatprep.subr.bf16.mxu0 0
    %490 = vmatpush2.bf16.msra.mxu0 0
    %491 = vmatprep.subr.bf16.mxu0 0
    %492 = vmatpush2.bf16.msra.mxu0 0
    %493 = vmatprep.subr.bf16.mxu0 0
    %494 = vmatpush2.bf16.msra.mxu0 0
    %495 = vmatprep.subr.bf16.mxu0 0
    %496 = vmatpush2.bf16.msra.mxu0 0
    %497 = vmatprep.subr.bf16.mxu0 0
    %498 = vmatpush2.bf16.msra.mxu0 0
    %499 = vmatprep.subr.bf16.mxu0 0
    %500 = vmatpush2.bf16.msra.mxu0 0
    %501 = vmatprep.subr.bf16.mxu0 0
    %502 = vmatpush2.bf16.msra.mxu0 0
    %503 = vmatprep.subr.bf16.mxu0 0
    %504 = vmatpush2.bf16.msra.mxu0 0
    %505 = vmatprep.mubr.bf16.mxu0 0
    %506 = vmatmul.mubr.bf16.gmra.mxu0 %v403
    %v507 = vpop.f32.mrf.mxu0
    %v508 = vadd.f32 %v424, %v507
    %v509 = vpop.f32.mrf.mxu0
    %v510 = vpop.f32.mrf.mxu0
    %v511 = vpop.f32.mrf.mxu0
    %512 = vdwg.mxu0
    %v513 = vmax.f32 %v508, 0.0
    %v514 = vpack.c.bf16 %v513, %v513
    %v515 = vld [vmem:[#allocation10] sm:$0xf]
    %v516 = vld [vmem:[#allocation10 + $0x4] sm:$0xf]
    %v517 = vld [vmem:[#allocation10 + $0x8] sm:$0xf]
    %v518 = vld [vmem:[#allocation10 + $0xc] sm:$0xf]
    %v519 = vld [vmem:[#allocation10 + $0x10] sm:$0xf]
    %v520 = vld [vmem:[#allocation10 + $0x14] sm:$0xf]
    %v521 = vld [vmem:[#allocation10 + $0x18] sm:$0xf]
    %v522 = vld [vmem:[#allocation10 + $0x1c] sm:$0xf]
    %v523 = vld [vmem:[#allocation10 + $0x20] sm:$0xf]
    %v524 = vld [vmem:[#allocation10 + $0x24] sm:$0xf]
    %v525 = vld [vmem:[#allocation10 + $0x28] sm:$0xf]
    %v526 = vld [vmem:[#allocation10 + $0x2c] sm:$0xf]
    %v527 = vld [vmem:[#allocation10 + $0x30] sm:$0xf]
    %v528 = vld [vmem:[#allocation10 + $0x34] sm:$0xf]
    %v529 = vld [vmem:[#allocation10 + $0x38] sm:$0xf]
    %v530 = vld [vmem:[#allocation10 + $0x3c] sm:$0xf]
    %v531 = vld [vmem:[#allocation5 + $0x2] sm:$0x1]
    %v532 = vlaneseq
    %v533 = vshrl.u32 %v532, 7
    %v534 = vsub.s32 0, %v533
    %v535 = vrot.slane %v531, %v534
    %v552 = vunpack.c.l.b16 %v515
    %v553 = vunpack.c.l.b16 %v516
    %v554 = vunpack.c.l.b16 %v517
    %v555 = vunpack.c.l.b16 %v518
    %v556 = vunpack.c.l.b16 %v519
    %v557 = vunpack.c.l.b16 %v520
    %v558 = vunpack.c.l.b16 %v521
    %v559 = vunpack.c.l.b16 %v522
    %v560 = vunpack.c.l.b16 %v523
    %v561 = vunpack.c.l.b16 %v524
    %v562 = vunpack.c.l.b16 %v525
    %v563 = vunpack.c.l.b16 %v526
    %v564 = vunpack.c.l.b16 %v527
    %v565 = vunpack.c.l.b16 %v528
    %v566 = vunpack.c.l.b16 %v529
    %v567 = vunpack.c.l.b16 %v530
    %v568 = vpack.c.b16 %v553, %v552
    %v569 = vpack.c.b16 %v555, %v554
    %v570 = vpack.c.b16 %v557, %v556
    %v571 = vpack.c.b16 %v559, %v558
    %v572 = vpack.c.b16 %v561, %v560
    %v573 = vpack.c.b16 %v563, %v562
    %v574 = vpack.c.b16 %v565, %v564
    %v575 = vpack.c.b16 %v567, %v566
    %584 = vmatprep.subr.bf16.mxu0 0
    %585 = vmatpush1.bf16.msra.mxu0 %v575
    %586 = vmatprep.subr.bf16.mxu0 0
    %587 = vmatpush1.bf16.msra.mxu0 %v574
    %588 = vmatprep.subr.bf16.mxu0 0
    %589 = vmatpush1.bf16.msra.mxu0 %v573
    %590 = vmatprep.subr.bf16.mxu0 0
    %591 = vmatpush1.bf16.msra.mxu0 %v572
    %592 = vmatprep.subr.bf16.mxu0 0
    %593 = vmatpush1.bf16.msra.mxu0 %v571
    %594 = vmatprep.subr.bf16.mxu0 0
    %595 = vmatpush1.bf16.msra.mxu0 %v570
    %596 = vmatprep.subr.bf16.mxu0 0
    %597 = vmatpush1.bf16.msra.mxu0 %v569
    %598 = vmatprep.subr.bf16.mxu0 0
    %599 = vmatpush1.bf16.msra.mxu0 %v568
    %600 = vmatprep.subr.bf16.mxu0 0
    %601 = vmatpush2.bf16.msra.mxu0 0
    %602 = vmatprep.subr.bf16.mxu0 0
    %603 = vmatpush2.bf16.msra.mxu0 0
    %604 = vmatprep.subr.bf16.mxu0 0
    %605 = vmatpush2.bf16.msra.mxu0 0
    %606 = vmatprep.subr.bf16.mxu0 0
    %607 = vmatpush2.bf16.msra.mxu0 0
    %608 = vmatprep.subr.bf16.mxu0 0
    %609 = vmatpush2.bf16.msra.mxu0 0
    %610 = vmatprep.subr.bf16.mxu0 0
    %611 = vmatpush2.bf16.msra.mxu0 0
    %612 = vmatprep.subr.bf16.mxu0 0
    %613 = vmatpush2.bf16.msra.mxu0 0
    %614 = vmatprep.subr.bf16.mxu0 0
    %615 = vmatpush2.bf16.msra.mxu0 0
    %616 = vmatprep.mubr.bf16.mxu0 0
    %617 = vmatmul.mubr.bf16.gmra.mxu0 %v514
    %v618 = vpop.f32.mrf.mxu0
    %v619 = vadd.f32 %v535, %v618
    %v620 = vpop.f32.mrf.mxu0
    %v621 = vpop.f32.mrf.mxu0
    %v622 = vpop.f32.mrf.mxu0
    %623 = vdwg.mxu0
    %v624 = vmax.f32 %v619, 0.0
    %v625 = vpack.c.bf16 %v624, %v624
    %v626 = vld [vmem:[#allocation11] sm:$0xf]
    %v627 = vld [vmem:[#allocation11 + $0x4] sm:$0xf]
    %v628 = vld [vmem:[#allocation11 + $0x8] sm:$0xf]
    %v629 = vld [vmem:[#allocation11 + $0xc] sm:$0xf]
    %v630 = vld [vmem:[#allocation11 + $0x10] sm:$0xf]
    %v631 = vld [vmem:[#allocation11 + $0x14] sm:$0xf]
    %v632 = vld [vmem:[#allocation11 + $0x18] sm:$0xf]
    %v633 = vld [vmem:[#allocation11 + $0x1c] sm:$0xf]
    %v634 = vld [vmem:[#allocation11 + $0x20] sm:$0xf]
    %v635 = vld [vmem:[#allocation11 + $0x24] sm:$0xf]
    %v636 = vld [vmem:[#allocation11 + $0x28] sm:$0xf]
    %v637 = vld [vmem:[#allocation11 + $0x2c] sm:$0xf]
    %v638 = vld [vmem:[#allocation11 + $0x30] sm:$0xf]
    %v639 = vld [vmem:[#allocation11 + $0x34] sm:$0xf]
    %v640 = vld [vmem:[#allocation11 + $0x38] sm:$0xf]
    %v641 = vld [vmem:[#allocation11 + $0x3c] sm:$0xf]
    %v642 = vld [vmem:[#allocation5 + $0x3] sm:$0x1]
    %v643 = vlaneseq
    %v644 = vshrl.u32 %v643, 7
    %v645 = vsub.s32 0, %v644
    %v646 = vrot.slane %v642, %v645
    %v663 = vunpack.c.l.b16 %v626
    %v664 = vunpack.c.l.b16 %v627
    %v665 = vunpack.c.l.b16 %v628
    %v666 = vunpack.c.l.b16 %v629
    %v667 = vunpack.c.l.b16 %v630
    %v668 = vunpack.c.l.b16 %v631
    %v669 = vunpack.c.l.b16 %v632
    %v670 = vunpack.c.l.b16 %v633
    %v671 = vunpack.c.l.b16 %v634
    %v672 = vunpack.c.l.b16 %v635
    %v673 = vunpack.c.l.b16 %v636
    %v674 = vunpack.c.l.b16 %v637
    %v675 = vunpack.c.l.b16 %v638
    %v676 = vunpack.c.l.b16 %v639
    %v677 = vunpack.c.l.b16 %v640
    %v678 = vunpack.c.l.b16 %v641
    %v679 = vpack.c.b16 %v664, %v663
    %v680 = vpack.c.b16 %v666, %v665
    %v681 = vpack.c.b16 %v668, %v667
    %v682 = vpack.c.b16 %v670, %v669
    %v683 = vpack.c.b16 %v672, %v671
    %v684 = vpack.c.b16 %v674, %v673
    %v685 = vpack.c.b16 %v676, %v675
    %v686 = vpack.c.b16 %v678, %v677
    %695 = vmatprep.subr.bf16.mxu0 0
    %696 = vmatpush1.bf16.msra.mxu0 %v686
    %697 = vmatprep.subr.bf16.mxu0 0
    %698 = vmatpush1.bf16.msra.mxu0 %v685
    %699 = vmatprep.subr.bf16.mxu0 0
    %700 = vmatpush1.bf16.msra.mxu0 %v684
    %701 = vmatprep.subr.bf16.mxu0 0
    %702 = vmatpush1.bf16.msra.mxu0 %v683
    %703 = vmatprep.subr.bf16.mxu0 0
    %704 = vmatpush1.bf16.msra.mxu0 %v682
    %705 = vmatprep.subr.bf16.mxu0 0
    %706 = vmatpush1.bf16.msra.mxu0 %v681
    %707 = vmatprep.subr.bf16.mxu0 0
    %708 = vmatpush1.bf16.msra.mxu0 %v680
    %709 = vmatprep.subr.bf16.mxu0 0
    %710 = vmatpush1.bf16.msra.mxu0 %v679
    %711 = vmatprep.subr.bf16.mxu0 0
    %712 = vmatpush2.bf16.msra.mxu0 0
    %713 = vmatprep.subr.bf16.mxu0 0
    %714 = vmatpush2.bf16.msra.mxu0 0
    %715 = vmatprep.subr.bf16.mxu0 0
    %716 = vmatpush2.bf16.msra.mxu0 0
    %717 = vmatprep.subr.bf16.mxu0 0
    %718 = vmatpush2.bf16.msra.mxu0 0
    %719 = vmatprep.subr.bf16.mxu0 0
    %720 = vmatpush2.bf16.msra.mxu0 0
    %721 = vmatprep.subr.bf16.mxu0 0
    %722 = vmatpush2.bf16.msra.mxu0 0
    %723 = vmatprep.subr.bf16.mxu0 0
    %724 = vmatpush2.bf16.msra.mxu0 0
    %725 = vmatprep.subr.bf16.mxu0 0
    %726 = vmatpush2.bf16.msra.mxu0 0
    %727 = vmatprep.mubr.bf16.mxu0 0
    %728 = vmatmul.mubr.bf16.gmra.mxu0 %v625
    %v729 = vpop.f32.mrf.mxu0
    %v730 = vadd.f32 %v646, %v729
    %v731 = vpop.f32.mrf.mxu0
    %v732 = vpop.f32.mrf.mxu0
    %v733 = vpop.f32.mrf.mxu0
    %734 = vdwg.mxu0
    %v735 = vmax.f32 %v730, 0.0
    %v736 = vpack.c.bf16 %v735, %v735
    %v737 = vld [vmem:[#allocation13] sm:$0xf]
    %v738 = vld [vmem:[#allocation13 + $0x4] sm:$0xf]
    %v739 = vld [vmem:[#allocation13 + $0x8] sm:$0xf]
    %v740 = vld [vmem:[#allocation13 + $0xc] sm:$0xf]
    %v741 = vld [vmem:[#allocation13 + $0x10] sm:$0xf]
    %v742 = vld [vmem:[#allocation13 + $0x14] sm:$0xf]
    %v743 = vld [vmem:[#allocation13 + $0x18] sm:$0xf]
    %v744 = vld [vmem:[#allocation13 + $0x1c] sm:$0xf]
    %v745 = vld [vmem:[#allocation13 + $0x20] sm:$0xf]
    %v746 = vld [vmem:[#allocation13 + $0x24] sm:$0xf]
    %v747 = vld [vmem:[#allocation13 + $0x28] sm:$0xf]
    %v748 = vld [vmem:[#allocation13 + $0x2c] sm:$0xf]
    %v749 = vld [vmem:[#allocation13 + $0x30] sm:$0xf]
    %v750 = vld [vmem:[#allocation13 + $0x34] sm:$0xf]
    %v751 = vld [vmem:[#allocation13 + $0x38] sm:$0xf]
    %v752 = vld [vmem:[#allocation13 + $0x3c] sm:$0xf]
    %v753 = vld [vmem:[#allocation5 + $0x4] sm:$0x1]
    %v754 = vlaneseq
    %v755 = vshrl.u32 %v754, 7
    %v756 = vsub.s32 0, %v755
    %v757 = vrot.slane %v753, %v756
    %v774 = vunpack.c.l.b16 %v737
    %v775 = vunpack.c.l.b16 %v738
    %v776 = vunpack.c.l.b16 %v739
    %v777 = vunpack.c.l.b16 %v740
    %v778 = vunpack.c.l.b16 %v741
    %v779 = vunpack.c.l.b16 %v742
    %v780 = vunpack.c.l.b16 %v743
    %v781 = vunpack.c.l.b16 %v744
    %v782 = vunpack.c.l.b16 %v745
    %v783 = vunpack.c.l.b16 %v746
    %v784 = vunpack.c.l.b16 %v747
    %v785 = vunpack.c.l.b16 %v748
    %v786 = vunpack.c.l.b16 %v749
    %v787 = vunpack.c.l.b16 %v750
    %v788 = vunpack.c.l.b16 %v751
    %v789 = vunpack.c.l.b16 %v752
    %v790 = vpack.c.b16 %v775, %v774
    %v791 = vpack.c.b16 %v777, %v776
    %v792 = vpack.c.b16 %v779, %v778
    %v793 = vpack.c.b16 %v781, %v780
    %v794 = vpack.c.b16 %v783, %v782
    %v795 = vpack.c.b16 %v785, %v784
    %v796 = vpack.c.b16 %v787, %v786
    %v797 = vpack.c.b16 %v789, %v788
    %806 = vmatprep.subr.bf16.mxu0 0
    %807 = vmatpush1.bf16.msra.mxu0 %v797
    %808 = vmatprep.subr.bf16.mxu0 0
    %809 = vmatpush1.bf16.msra.mxu0 %v796
    %810 = vmatprep.subr.bf16.mxu0 0
    %811 = vmatpush1.bf16.msra.mxu0 %v795
    %812 = vmatprep.subr.bf16.mxu0 0
    %813 = vmatpush1.bf16.msra.mxu0 %v794
    %814 = vmatprep.subr.bf16.mxu0 0
    %815 = vmatpush1.bf16.msra.mxu0 %v793
    %816 = vmatprep.subr.bf16.mxu0 0
    %817 = vmatpush1.bf16.msra.mxu0 %v792
    %818 = vmatprep.subr.bf16.mxu0 0
    %819 = vmatpush1.bf16.msra.mxu0 %v791
    %820 = vmatprep.subr.bf16.mxu0 0
    %821 = vmatpush1.bf16.msra.mxu0 %v790
    %822 = vmatprep.subr.bf16.mxu0 0
    %823 = vmatpush2.bf16.msra.mxu0 0
    %824 = vmatprep.subr.bf16.mxu0 0
    %825 = vmatpush2.bf16.msra.mxu0 0
    %826 = vmatprep.subr.bf16.mxu0 0
    %827 = vmatpush2.bf16.msra.mxu0 0
    %828 = vmatprep.subr.bf16.mxu0 0
    %829 = vmatpush2.bf16.msra.mxu0 0
    %830 = vmatprep.subr.bf16.mxu0 0
    %831 = vmatpush2.bf16.msra.mxu0 0
    %832 = vmatprep.subr.bf16.mxu0 0
    %833 = vmatpush2.bf16.msra.mxu0 0
    %834 = vmatprep.subr.bf16.mxu0 0
    %835 = vmatpush2.bf16.msra.mxu0 0
    %836 = vmatprep.subr.bf16.mxu0 0
    %837 = vmatpush2.bf16.msra.mxu0 0
    %838 = vmatprep.mubr.bf16.mxu0 0
    %839 = vmatmul.mubr.bf16.gmra.mxu0 %v736
    %v840 = vpop.f32.mrf.mxu0
    %v841 = vadd.f32 %v757, %v840
    %v842 = vpop.f32.mrf.mxu0
    %v843 = vpop.f32.mrf.mxu0
    %v844 = vpop.f32.mrf.mxu0
    %845 = vdwg.mxu0
    %846 = vst [vmem:[#allocation14] sm:$0xff] %v841
    // Predicated region
    $region58: #{tpu_custom_call.1} parent=1 // pred_check
      _
    $region59: #{tpu_custom_call.1} parent=1 // pred_check_branch
      %848 = sbr.rel (0) target = $region61
    $region60: #{tpu_custom_call.1} parent=1 // pred_region
      %s850 = ssub.s32 128, 128
      %851 = vsyncadd [#allocation4], %s850
      %s853 = sshll.u32 [#allocation14], 4
      %s854 = int_to_ptr.vmem [resolvable:$true] %s853
      %856 = dma.vmem_to_hbm [thread:$0]  %s854, 128, %s7, [#allocation4]
    $region61: #{tpu_custom_call.1} parent=1 // pred_fallthru
      _
    // Predicated region
    $region62: #{tpu_custom_call.1} parent=1 // pred_check
      _
    $region63: #{tpu_custom_call.1} parent=1 // pred_check_branch
      %858 = sbr.rel (0) target = $region65
    $region64: #{tpu_custom_call.1} parent=1 // pred_region
      %859 = dma.done [#allocation4], 128
    $region65: #{tpu_custom_call.1} parent=1 // pred_fallthru
      _
    %860 = vsyncpa [#allocation3], 1
    %861 = vsyncpa [#allocation6], 1
    %862 = vsyncpa [#allocation9], 1
    %863 = vsyncpa [#allocation12], 1
    %864 = vsyncpa [#allocation4], 1

</llo_original>
